<compile_context>
chip_gen: v7x
topology: tpu7x:2x2x1
jax: 0.10.0
libtpu: 0.0.40
codegen_flags: <defaults>
</compile_context>

<pallas_src>
import jax
import jax.numpy as jnp
from jax.experimental import pallas as pl
from jax.experimental.pallas import tpu as pltpu

# Model / problem sizes (small, consistent with the module's __init__).
IN_CHANNELS = 4
SPLIT = IN_CHANNELS // 2          # 2
HIDDEN = 32                       # `channels`
KSIZE = 3                         # `kernel_size`
NLAYERS = 3                       # `num_layers`
T = 128                           # sequence length (lane-aligned)
B = 2                             # batch
BT = B * T                        # folded lane width (batch folded onto lanes)

# MXU operand dtype for the hidden-layer matmuls (f32 accumulation kept via
# preferred_element_type).  The gated unit and the end/log-det path stay f32.
MM_DTYPE = jnp.bfloat16


# --------------------------------------------------------------------------
# Pallas kernel: whole AffineCoupling._transform, all batch elements at once.
# --------------------------------------------------------------------------
def affine_coupling_kernel(z_ref, mask_ref, sw_ref, sb_ref, inw_ref, inb_ref,
                           rsw_ref, rsb_ref, ew_ref, eb_ref,
                           z_out_ref, logsum_ref):
    S, H, K, L = SPLIT, HIDDEN, KSIZE, NLAYERS

    z = z_ref[...]                                              # (B, C, T)
    # Fold batch into the lane axis -> (channels, B*T) slabs (128-aligned concat).
    z0 = jnp.concatenate([z[b, :S] for b in range(B)], axis=-1).astype(jnp.float32)
    z1 = jnp.concatenate([z[b, S:] for b in range(B)], axis=-1).astype(jnp.float32)
    mask = jnp.concatenate([mask_ref[b] for b in range(B)],
                           axis=-1).astype(jnp.float32)         # (1, BT)

    # `start` (weight-normed) 1x1 conv: contraction dim is only 2, so do it on
    # the VPU as broadcast FMAs instead of wasting an MXU push.
    sw = sw_ref[...]                                            # (H, S) f32
    x = sw[:, 0:1] * z1[0:1] + sw[:, 1:2] * z1[1:2] + sb_ref[...]
    x = x * mask                                                # (H, BT) f32

    out = jnp.zeros((H, BT), jnp.float32)                       # skip accumulator
    lane = jax.lax.broadcasted_iota(jnp.int32, (1, BT), 1)
    pos = lane % T                                              # position inside each batch segment

    for i in range(L):                                          # WaveNet layers (static unroll)
        dil = 2 ** i
        taps = []
        for tap in range(K):                                    # 'same' zero padding per segment
            off = (tap - (K - 1) // 2) * dil                    # -dil, 0, +dil
            if off == 0:
                xs = x
            else:
                # Static-shift roll over the folded lane axis; the mask kills
                # both the conv zero-padding region and any cross-batch wrap.
                xs = jnp.roll(x, -off, axis=1)
                valid = jnp.logical_and(pos + off >= 0, pos + off < T)
                xs = jnp.where(valid, xs, 0.0)
            taps.append(xs.astype(MM_DTYPE))
        xs_cat = jnp.concatenate(taps, axis=0)                  # (K*H, BT)

        # Fused dilated conv: a single MXU matmul (contraction = K*H = 96).
        pre = jnp.dot(inw_ref[i], xs_cat,
                      preferred_element_type=jnp.float32) + inb_ref[i]      # (2H, BT)

        # Gated activation unit (f32: safe on v5e, tight numerics everywhere).
        # tanh / sigmoid go to the EUP (separate bundle slot).
        acts = (jnp.tanh(pre[:H]) * jax.nn.sigmoid(pre[H:])).astype(MM_DTYPE)

        if i < L - 1:
            rs = jnp.dot(rsw_ref[i], acts,
                         preferred_element_type=jnp.float32) + rsb_ref[i]   # (2H, BT)
            x = (x + rs[:H]) * mask
            out = out + rs[H:]
        else:
            # Last layer is skip-only: use just the skip half of the weights
            # and drop the residual x-update (its residual half is zero anyway).
            skip = jnp.dot(rsw_ref[i][H:], acts,
                           preferred_element_type=jnp.float32) + rsb_ref[i][H:]
            out = out + skip
    out = out * mask

    # `end` 1x1 conv producing (t, logs).  Kept in f32: it feeds exp() and the
    # log-det reduction of the flow.
    params = jnp.dot(ew_ref[...], out,
                     preferred_element_type=jnp.float32) + eb_ref[...]      # (2S, BT)
    t = params[:S]
    logs = params[S:]

    z0n = (z0 * jnp.exp(logs) + t) * mask                       # (S, BT)
    logs_m = logs * mask

    # Full (B, C, T) output (z1 passed through in-kernel) + per-batch
    # sum(logs * mask) broadcast into a lane-aligned row.
    rows = []
    for b in range(B):
        lo, hi = b * T, (b + 1) * T
        z_out_ref[b] = jnp.concatenate([z0n[:, lo:hi], z[b, S:]],
                                       axis=0).astype(z_out_ref.dtype)
        s = jnp.sum(logs_m[:, lo:hi], axis=1, keepdims=True)    # (S, 1)
        s = jnp.sum(s, axis=0, keepdims=True)                   # (1, 1)
        rows.append(jnp.broadcast_to(s, (1, 128)))
    logsum_ref[...] = jnp.concatenate(rows, axis=0)             # (B, 128)


# --------------------------------------------------------------------------
# Wrapper
# --------------------------------------------------------------------------
def affine_coupling_forward(z, z_mask, log_df_dz, params):
    """z: (B, C, T) f32, z_mask: (B, 1, T) f32, log_df_dz: (B,) f32."""
    sw, sb, inw, inb, rsw, rsb, ew, eb = params

    # One-time parameter reshuffle (would be precomputed in a real model):
    # fuse the K conv taps into one contraction axis, cast the hidden-layer
    # matmul operands to bf16 (f32 accumulation happens inside the kernel).
    inw_f = jnp.transpose(inw, (0, 2, 1, 3)).reshape(
        NLAYERS, 2 * HIDDEN, KSIZE * HIDDEN).astype(MM_DTYPE)
    rsw_c = rsw.astype(MM_DTYPE)

    def full_spec(a):
        nd = a.ndim
        return pl.BlockSpec(a.shape, lambda i, _nd=nd: (0,) * _nd)

    grid_spec = pltpu.PrefetchScalarGridSpec(
        num_scalar_prefetch=0,
        grid=(1,),                       # batch folded onto lanes in-kernel
        in_specs=[
            full_spec(z), full_spec(z_mask),
            full_spec(sw), full_spec(sb),
            full_spec(inw_f), full_spec(inb),
            full_spec(rsw_c), full_spec(rsb),
            full_spec(ew), full_spec(eb),
        ],
        out_specs=[
            pl.BlockSpec((B, IN_CHANNELS, T), lambda i: (0, 0, 0)),   # full z out
            pl.BlockSpec((B, 128), lambda i: (0, 0)),                 # sum(logs*mask)
        ],
    )

    z_out, logsum = pl.pallas_call(
        affine_coupling_kernel,
        out_shape=(
            jax.ShapeDtypeStruct((B, IN_CHANNELS, T), z.dtype),
            jax.ShapeDtypeStruct((B, 128), jnp.float32),
        ),
        grid_spec=grid_spec,
        compiler_params=pltpu.CompilerParams(
            dimension_semantics=("arbitrary",)),
    )(z, z_mask, sw, sb, inw_f, inb, rsw_c, rsb, ew, eb)

    return z_out, log_df_dz + logsum[:, 0]


# --------------------------------------------------------------------------
# Pure-JAX reference (module semantics, f32) for a correctness cross-check.
# --------------------------------------------------------------------------
def reference_forward(z, z_mask, log_df_dz, params):
    sw, sb, inw, inb, rsw, rsb, ew, eb = params
    z0, z1 = z[:, :SPLIT], z[:, SPLIT:]
    mask = z_mask
    x = (jnp.einsum('oc,bct->bot', sw, z1) + sb[None]) * mask
    out = jnp.zeros_like(x)
    t_idx = jnp.arange(T)
    for i in range(NLAYERS):
        dil = 2 ** i
        pre = jnp.zeros((z.shape[0], 2 * HIDDEN, T), jnp.float32)
        for tap in range(KSIZE):
            off = (tap - (KSIZE - 1) // 2) * dil
            xs = jnp.roll(x, -off, axis=-1)
            valid = ((t_idx + off) >= 0) & ((t_idx + off) < T)
            xs = jnp.where(valid[None, None, :], xs, 0.0)
            pre = pre + jnp.einsum('oc,bct->bot', inw[i, tap], xs)
        pre = pre + inb[i][None]
        acts = jnp.tanh(pre[:, :HIDDEN]) * jax.nn.sigmoid(pre[:, HIDDEN:])
        rs = jnp.einsum('oc,bct->bot', rsw[i], acts) + rsb[i][None]
        x = (x + rs[:, :HIDDEN]) * mask
        out = out + rs[:, HIDDEN:]
    out = out * mask
    p = jnp.einsum('oc,bct->bot', ew, out) + eb[None]
    t, logs = p[:, :SPLIT], p[:, SPLIT:]
    z0n = (z0 * jnp.exp(logs) + t) * mask
    return (jnp.concatenate([z0n, z1], axis=1),
            log_df_dz + jnp.sum(logs * mask, axis=(1, 2)))


# --------------------------------------------------------------------------
# Deterministic parameter construction (per module __init__ shapes).
# --------------------------------------------------------------------------
def init_params(key, zero_end=True):
    ks = jax.random.split(key, 8)
    s = 0.1
    sw = jax.random.normal(ks[0], (HIDDEN, SPLIT), jnp.float32) * s
    sb = jax.random.normal(ks[1], (HIDDEN, 1), jnp.float32) * s
    inw = jax.random.normal(ks[2], (NLAYERS, KSIZE, 2 * HIDDEN, HIDDEN),
                            jnp.float32) * s
    inb = jax.random.normal(ks[3], (NLAYERS, 2 * HIDDEN, 1), jnp.float32) * s
    rsw = jax.random.normal(ks[4], (NLAYERS, 2 * HIDDEN, HIDDEN),
                            jnp.float32) * s
    rsb = jax.random.normal(ks[5], (NLAYERS, 2 * HIDDEN, 1), jnp.float32) * s
    # Last WaveNet layer produces skip channels only -> zero its residual half.
    rsw = rsw.at[NLAYERS - 1, :HIDDEN].set(0.0)
    rsb = rsb.at[NLAYERS - 1, :HIDDEN].set(0.0)
    if zero_end:
        # Faithful to AffineCoupling.__init__: end conv weight/bias zeroed
        # (coupling is the identity at init).
        ew = jnp.zeros((2 * SPLIT, HIDDEN), jnp.float32)
        eb = jnp.zeros((2 * SPLIT, 1), jnp.float32)
    else:
        ew = jax.random.normal(ks[6], (2 * SPLIT, HIDDEN), jnp.float32) * s
        eb = jax.random.normal(ks[7], (2 * SPLIT, 1), jnp.float32) * s
    return sw, sb, inw, inb, rsw, rsb, ew, eb


if __name__ == "__main__":
    key = jax.random.PRNGKey(0)
    k_z, k_l, k_p = jax.random.split(key, 3)

    z = jax.random.normal(k_z, (B, IN_CHANNELS, T), jnp.float32)
    lengths = jnp.array([T, 96], jnp.int32)
    z_mask = (jnp.arange(T)[None, None, :] < lengths[:, None, None]).astype(jnp.float32)
    log_df_dz = jax.random.normal(k_l, (B,), jnp.float32) * 0.1

    # 1) Module-faithful parameters (end conv zero-initialized -> identity
    #    coupling; result is exact regardless of the bf16 hidden matmuls).
    params = init_params(k_p, zero_end=True)
    z_out, ld_out = jax.block_until_ready(
        affine_coupling_forward(z, z_mask, log_df_dz, params))
    z_ref, ld_ref = reference_forward(z, z_mask, log_df_dz, params)
    assert jnp.allclose(z_out, z_ref, atol=1e-4, rtol=1e-4)
    assert jnp.allclose(ld_out, ld_ref, atol=1e-4, rtol=1e-4)

    # 2) Extra sanity check with a non-zero end conv to exercise the exp/logdet
    #    path.  Hidden-layer matmuls use bf16 operands (f32 accumulation), so
    #    tolerances vs. the pure-f32 reference are correspondingly looser.
    params2 = init_params(k_p, zero_end=False)
    z_out2, ld_out2 = jax.block_until_ready(
        affine_coupling_forward(z, z_mask, log_df_dz, params2))
    z_ref2, ld_ref2 = reference_forward(z, z_mask, log_df_dz, params2)
    assert jnp.allclose(z_out2, z_ref2, atol=2e-2, rtol=2e-2)
    assert jnp.allclose(ld_out2, ld_ref2, atol=1.0, rtol=2e-2)

    print("KERNEL_OK")
</pallas_src>

<mosaic_0001>
module attributes {stable_mosaic.version = 11 : i64} {
  func.func @affine_coupling_kernel(%arg0: i32, %arg1: memref<2x4x128xf32, #tpu.memory_space<vmem>>, %arg2: memref<2x1x128xf32, #tpu.memory_space<vmem>>, %arg3: memref<32x2xf32, #tpu.memory_space<vmem>>, %arg4: memref<32x1xf32, #tpu.memory_space<vmem>>, %arg5: memref<3x64x96xbf16, #tpu.memory_space<vmem>>, %arg6: memref<3x64x1xf32, #tpu.memory_space<vmem>>, %arg7: memref<3x64x32xbf16, #tpu.memory_space<vmem>>, %arg8: memref<3x64x1xf32, #tpu.memory_space<vmem>>, %arg9: memref<4x32xf32, #tpu.memory_space<vmem>>, %arg10: memref<4x1xf32, #tpu.memory_space<vmem>>, %arg11: memref<2x4x128xf32, #tpu.memory_space<vmem>>, %arg12: memref<2x128xf32, #tpu.memory_space<vmem>>) attributes {dimension_semantics = [#tpu.dimension_semantics<arbitrary>], iteration_bounds = array<i64: 1>, scalar_prefetch = 0 : i64, scratch_operands = 0 : i64, tpu.core_type = #tpu.core_type<tc>, window_params = [{pipeline_mode = #tpu.pipeline_mode<synchronous>, transform_indices = @transform_0, window_bounds = array<i64: 2, 4, 128>}, {pipeline_mode = #tpu.pipeline_mode<synchronous>, transform_indices = @transform_1, window_bounds = array<i64: 2, 1, 128>}, {pipeline_mode = #tpu.pipeline_mode<synchronous>, transform_indices = @transform_2, window_bounds = array<i64: 32, 2>}, {pipeline_mode = #tpu.pipeline_mode<synchronous>, transform_indices = @transform_3, window_bounds = array<i64: 32, 1>}, {pipeline_mode = #tpu.pipeline_mode<synchronous>, transform_indices = @transform_4, window_bounds = array<i64: 3, 64, 96>}, {pipeline_mode = #tpu.pipeline_mode<synchronous>, transform_indices = @transform_5, window_bounds = array<i64: 3, 64, 1>}, {pipeline_mode = #tpu.pipeline_mode<synchronous>, transform_indices = @transform_6, window_bounds = array<i64: 3, 64, 32>}, {pipeline_mode = #tpu.pipeline_mode<synchronous>, transform_indices = @transform_7, window_bounds = array<i64: 3, 64, 1>}, {pipeline_mode = #tpu.pipeline_mode<synchronous>, transform_indices = @transform_8, window_bounds = array<i64: 4, 32>}, {pipeline_mode = #tpu.pipeline_mode<synchronous>, transform_indices = @transform_9, window_bounds = array<i64: 4, 1>}, {pipeline_mode = #tpu.pipeline_mode<synchronous>, transform_indices = @transform_10, window_bounds = array<i64: 2, 4, 128>}, {pipeline_mode = #tpu.pipeline_mode<synchronous>, transform_indices = @transform_11, window_bounds = array<i64: 2, 128>}]} {
    %c0 = arith.constant 0 : index
    %c0_0 = arith.constant 0 : index
    %c0_1 = arith.constant 0 : index
    %0 = vector.load %arg1[%c0, %c0_0, %c0_1] : memref<2x4x128xf32, #tpu.memory_space<vmem>>, vector<2x4x128xf32>
    %1 = vector.extract_strided_slice %0 {offsets = [0, 0, 0], sizes = [1, 2, 128], strides = [1, 1, 1]} : vector<2x4x128xf32> to vector<1x2x128xf32>
    %2 = vector.shape_cast %1 : vector<1x2x128xf32> to vector<2x128xf32>
    %3 = vector.extract_strided_slice %0 {offsets = [1, 0, 0], sizes = [1, 2, 128], strides = [1, 1, 1]} : vector<2x4x128xf32> to vector<1x2x128xf32>
    %4 = vector.shape_cast %3 : vector<1x2x128xf32> to vector<2x128xf32>
    %5 = tpu.concatenate %2, %4 in 1 : vector<2x128xf32>, vector<2x128xf32> -> vector<2x256xf32>
    %6 = vector.extract_strided_slice %0 {offsets = [0, 2, 0], sizes = [1, 2, 128], strides = [1, 1, 1]} : vector<2x4x128xf32> to vector<1x2x128xf32>
    %7 = vector.shape_cast %6 : vector<1x2x128xf32> to vector<2x128xf32>
    %8 = vector.extract_strided_slice %0 {offsets = [1, 2, 0], sizes = [1, 2, 128], strides = [1, 1, 1]} : vector<2x4x128xf32> to vector<1x2x128xf32>
    %9 = vector.shape_cast %8 : vector<1x2x128xf32> to vector<2x128xf32>
    %10 = tpu.concatenate %7, %9 in 1 : vector<2x128xf32>, vector<2x128xf32> -> vector<2x256xf32>
    %c0_2 = arith.constant 0 : index
    %c0_3 = arith.constant 0 : index
    %c0_4 = arith.constant 0 : index
    %11 = vector.load %arg2[%c0_2, %c0_3, %c0_4] : memref<2x1x128xf32, #tpu.memory_space<vmem>>, vector<1x1x128xf32>
    %12 = vector.shape_cast %11 : vector<1x1x128xf32> to vector<1x128xf32>
    %c1 = arith.constant 1 : index
    %c0_5 = arith.constant 0 : index
    %c0_6 = arith.constant 0 : index
    %13 = vector.load %arg2[%c1, %c0_5, %c0_6] : memref<2x1x128xf32, #tpu.memory_space<vmem>>, vector<1x1x128xf32>
    %14 = vector.shape_cast %13 : vector<1x1x128xf32> to vector<1x128xf32>
    %15 = tpu.concatenate %12, %14 in 1 : vector<1x128xf32>, vector<1x128xf32> -> vector<1x256xf32>
    %c0_7 = arith.constant 0 : index
    %c0_8 = arith.constant 0 : index
    %16 = vector.load %arg3[%c0_7, %c0_8] : memref<32x2xf32, #tpu.memory_space<vmem>>, vector<32x2xf32>
    %17 = vector.extract_strided_slice %16 {offsets = [0, 0], sizes = [32, 1], strides = [1, 1]} : vector<32x2xf32> to vector<32x1xf32>
    %18 = vector.extract_strided_slice %10 {offsets = [0, 0], sizes = [1, 256], strides = [1, 1]} : vector<2x256xf32> to vector<1x256xf32>
    %19 = vector.broadcast %17 : vector<32x1xf32> to vector<32x256xf32>
    %20 = vector.broadcast %18 : vector<1x256xf32> to vector<32x256xf32>
    %21 = arith.mulf %19, %20 : vector<32x256xf32>
    %22 = vector.extract_strided_slice %16 {offsets = [0, 1], sizes = [32, 1], strides = [1, 1]} : vector<32x2xf32> to vector<32x1xf32>
    %23 = vector.extract_strided_slice %10 {offsets = [1, 0], sizes = [1, 256], strides = [1, 1]} : vector<2x256xf32> to vector<1x256xf32>
    %24 = vector.broadcast %22 : vector<32x1xf32> to vector<32x256xf32>
    %25 = vector.broadcast %23 : vector<1x256xf32> to vector<32x256xf32>
    %26 = arith.mulf %24, %25 : vector<32x256xf32>
    %27 = arith.addf %21, %26 : vector<32x256xf32>
    %c0_9 = arith.constant 0 : index
    %c0_10 = arith.constant 0 : index
    %28 = vector.load %arg4[%c0_9, %c0_10] : memref<32x1xf32, #tpu.memory_space<vmem>>, vector<32x1xf32>
    %29 = vector.broadcast %28 : vector<32x1xf32> to vector<32x256xf32>
    %30 = arith.addf %27, %29 : vector<32x256xf32>
    %31 = vector.broadcast %15 : vector<1x256xf32> to vector<32x256xf32>
    %32 = arith.mulf %30, %31 : vector<32x256xf32>
    %cst = arith.constant 0.000000e+00 : f32
    %33 = vector.broadcast %cst : f32 to vector<32x256xf32>
    %34 = tpu.iota {dimensions = array<i32: 1>} : vector<1x256xi32>
    %c128_i32 = arith.constant 128 : i32
    %c0_i32 = arith.constant 0 : i32
    %35 = arith.cmpi eq, %c128_i32, %c0_i32 : i32
    %c1_i32 = arith.constant 1 : i32
    %36 = arith.select %35, %c1_i32, %c128_i32 : i32
    %37 = vector.broadcast %36 : i32 to vector<1x256xi32>
    %38 = arith.remsi %34, %37 : vector<1x256xi32>
    %c0_i32_11 = arith.constant 0 : i32
    %39 = vector.broadcast %c0_i32_11 : i32 to vector<1x256xi32>
    %40 = arith.cmpi ne, %38, %39 : vector<1x256xi32>
    %c0_i32_12 = arith.constant 0 : i32
    %41 = vector.broadcast %c0_i32_12 : i32 to vector<1x256xi32>
    %42 = arith.cmpi slt, %38, %41 : vector<1x256xi32>
    %c0_i32_13 = arith.constant 0 : i32
    %43 = arith.cmpi slt, %36, %c0_i32_13 : i32
    %44 = vector.broadcast %43 : i1 to vector<1x256xi1>
    %45 = vector.broadcast %44 : vector<1x256xi1> to vector<1x256xi1>
    %46 = arith.xori %42, %45 : vector<1x256xi1>
    %47 = arith.andi %46, %40 : vector<1x256xi1>
    %48 = vector.broadcast %36 : i32 to vector<1x256xi32>
    %49 = arith.addi %38, %48 : vector<1x256xi32>
    %50 = arith.select %47, %49, %38 : vector<1x256xi1>, vector<1x256xi32>
    %51 = vector.extract_strided_slice %32 {offsets = [0, 255], sizes = [32, 1], strides = [1, 1]} : vector<32x256xf32> to vector<32x1xf32>
    %52 = vector.extract_strided_slice %32 {offsets = [0, 0], sizes = [32, 255], strides = [1, 1]} : vector<32x256xf32> to vector<32x255xf32>
    %53 = tpu.concatenate %51, %52 in 1 : vector<32x1xf32>, vector<32x255xf32> -> vector<32x256xf32>
    %c-1_i32 = arith.constant -1 : i32
    %54 = vector.broadcast %c-1_i32 : i32 to vector<1x256xi32>
    %55 = arith.addi %50, %54 : vector<1x256xi32>
    %c0_i32_14 = arith.constant 0 : i32
    %56 = vector.broadcast %c0_i32_14 : i32 to vector<1x256xi32>
    %57 = arith.cmpi sge, %55, %56 : vector<1x256xi32>
    %c-1_i32_15 = arith.constant -1 : i32
    %58 = vector.broadcast %c-1_i32_15 : i32 to vector<1x256xi32>
    %59 = arith.addi %50, %58 : vector<1x256xi32>
    %c128_i32_16 = arith.constant 128 : i32
    %60 = vector.broadcast %c128_i32_16 : i32 to vector<1x256xi32>
    %61 = arith.cmpi slt, %59, %60 : vector<1x256xi32>
    %62 = arith.andi %57, %61 : vector<1x256xi1>
    %cst_17 = arith.constant 0.000000e+00 : f32
    %63 = vector.shape_cast %62 : vector<1x256xi1> to vector<1x256xi1>
    %64 = vector.broadcast %63 : vector<1x256xi1> to vector<32x256xi1>
    %65 = vector.broadcast %cst_17 : f32 to vector<32x256xf32>
    %66 = arith.select %64, %53, %65 : vector<32x256xi1>, vector<32x256xf32>
    %67 = arith.truncf %66 : vector<32x256xf32> to vector<32x256xbf16>
    %68 = arith.truncf %32 : vector<32x256xf32> to vector<32x256xbf16>
    %69 = vector.extract_strided_slice %32 {offsets = [0, 1], sizes = [32, 255], strides = [1, 1]} : vector<32x256xf32> to vector<32x255xf32>
    %70 = vector.extract_strided_slice %32 {offsets = [0, 0], sizes = [32, 1], strides = [1, 1]} : vector<32x256xf32> to vector<32x1xf32>
    %71 = tpu.concatenate %69, %70 in 1 : vector<32x255xf32>, vector<32x1xf32> -> vector<32x256xf32>
    %c1_i32_18 = arith.constant 1 : i32
    %72 = vector.broadcast %c1_i32_18 : i32 to vector<1x256xi32>
    %73 = arith.addi %50, %72 : vector<1x256xi32>
    %c0_i32_19 = arith.constant 0 : i32
    %74 = vector.broadcast %c0_i32_19 : i32 to vector<1x256xi32>
    %75 = arith.cmpi sge, %73, %74 : vector<1x256xi32>
    %c1_i32_20 = arith.constant 1 : i32
    %76 = vector.broadcast %c1_i32_20 : i32 to vector<1x256xi32>
    %77 = arith.addi %50, %76 : vector<1x256xi32>
    %c128_i32_21 = arith.constant 128 : i32
    %78 = vector.broadcast %c128_i32_21 : i32 to vector<1x256xi32>
    %79 = arith.cmpi slt, %77, %78 : vector<1x256xi32>
    %80 = arith.andi %75, %79 : vector<1x256xi1>
    %cst_22 = arith.constant 0.000000e+00 : f32
    %81 = vector.shape_cast %80 : vector<1x256xi1> to vector<1x256xi1>
    %82 = vector.broadcast %81 : vector<1x256xi1> to vector<32x256xi1>
    %83 = vector.broadcast %cst_22 : f32 to vector<32x256xf32>
    %84 = arith.select %82, %71, %83 : vector<32x256xi1>, vector<32x256xf32>
    %85 = arith.truncf %84 : vector<32x256xf32> to vector<32x256xbf16>
    %86 = tpu.concatenate %67, %68, %85 in 0 : vector<32x256xbf16>, vector<32x256xbf16>, vector<32x256xbf16> -> vector<96x256xbf16>
    %c0_23 = arith.constant 0 : index
    %c0_24 = arith.constant 0 : index
    %c0_25 = arith.constant 0 : index
    %87 = vector.load %arg5[%c0_23, %c0_24, %c0_25] : memref<3x64x96xbf16, #tpu.memory_space<vmem>>, vector<1x64x96xbf16>
    %88 = vector.shape_cast %87 : vector<1x64x96xbf16> to vector<64x96xbf16>
    %cst_26 = arith.constant dense<0.000000e+00> : vector<64x256xf32>
    %89 = tpu.matmul %88, %86, %cst_26 {dimension_numbers = #tpu.dot_dimension_numbers<[1], [0], [0], [1], [0, 0, 1, 1], [], []>} : vector<64x96xbf16>, vector<96x256xbf16>, vector<64x256xf32> -> vector<64x256xf32>
    %c0_27 = arith.constant 0 : index
    %c0_28 = arith.constant 0 : index
    %c0_29 = arith.constant 0 : index
    %90 = vector.load %arg6[%c0_27, %c0_28, %c0_29] : memref<3x64x1xf32, #tpu.memory_space<vmem>>, vector<1x64x1xf32>
    %91 = vector.shape_cast %90 : vector<1x64x1xf32> to vector<64x1xf32>
    %92 = vector.broadcast %91 : vector<64x1xf32> to vector<64x256xf32>
    %93 = arith.addf %89, %92 : vector<64x256xf32>
    %94 = vector.extract_strided_slice %93 {offsets = [0, 0], sizes = [32, 256], strides = [1, 1]} : vector<64x256xf32> to vector<32x256xf32>
    %95 = math.tanh %94 : vector<32x256xf32>
    %96 = vector.extract_strided_slice %93 {offsets = [32, 0], sizes = [32, 256], strides = [1, 1]} : vector<64x256xf32> to vector<32x256xf32>
    %97 = arith.negf %96 : vector<32x256xf32>
    %98 = math.exp %97 : vector<32x256xf32>
    %cst_30 = arith.constant 1.000000e+00 : f32
    %99 = vector.broadcast %cst_30 : f32 to vector<32x256xf32>
    %100 = arith.addf %99, %98 : vector<32x256xf32>
    %101 = arith.divf %99, %100 : vector<32x256xf32>
    %102 = arith.mulf %95, %101 : vector<32x256xf32>
    %103 = arith.truncf %102 : vector<32x256xf32> to vector<32x256xbf16>
    %c0_31 = arith.constant 0 : index
    %c0_32 = arith.constant 0 : index
    %c0_33 = arith.constant 0 : index
    %104 = vector.load %arg7[%c0_31, %c0_32, %c0_33] : memref<3x64x32xbf16, #tpu.memory_space<vmem>>, vector<1x64x32xbf16>
    %105 = vector.shape_cast %104 : vector<1x64x32xbf16> to vector<64x32xbf16>
    %cst_34 = arith.constant dense<0.000000e+00> : vector<64x256xf32>
    %106 = tpu.matmul %105, %103, %cst_34 {dimension_numbers = #tpu.dot_dimension_numbers<[1], [0], [0], [1], [0, 0, 1, 1], [], []>} : vector<64x32xbf16>, vector<32x256xbf16>, vector<64x256xf32> -> vector<64x256xf32>
    %c0_35 = arith.constant 0 : index
    %c0_36 = arith.constant 0 : index
    %c0_37 = arith.constant 0 : index
    %107 = vector.load %arg8[%c0_35, %c0_36, %c0_37] : memref<3x64x1xf32, #tpu.memory_space<vmem>>, vector<1x64x1xf32>
    %108 = vector.shape_cast %107 : vector<1x64x1xf32> to vector<64x1xf32>
    %109 = vector.broadcast %108 : vector<64x1xf32> to vector<64x256xf32>
    %110 = arith.addf %106, %109 : vector<64x256xf32>
    %111 = vector.extract_strided_slice %110 {offsets = [0, 0], sizes = [32, 256], strides = [1, 1]} : vector<64x256xf32> to vector<32x256xf32>
    %112 = arith.addf %32, %111 : vector<32x256xf32>
    %113 = vector.broadcast %15 : vector<1x256xf32> to vector<32x256xf32>
    %114 = arith.mulf %112, %113 : vector<32x256xf32>
    %115 = vector.extract_strided_slice %110 {offsets = [32, 0], sizes = [32, 256], strides = [1, 1]} : vector<64x256xf32> to vector<32x256xf32>
    %116 = arith.addf %33, %115 : vector<32x256xf32>
    %117 = vector.extract_strided_slice %114 {offsets = [0, 254], sizes = [32, 2], strides = [1, 1]} : vector<32x256xf32> to vector<32x2xf32>
    %118 = vector.extract_strided_slice %114 {offsets = [0, 0], sizes = [32, 254], strides = [1, 1]} : vector<32x256xf32> to vector<32x254xf32>
    %119 = tpu.concatenate %117, %118 in 1 : vector<32x2xf32>, vector<32x254xf32> -> vector<32x256xf32>
    %c-2_i32 = arith.constant -2 : i32
    %120 = vector.broadcast %c-2_i32 : i32 to vector<1x256xi32>
    %121 = arith.addi %50, %120 : vector<1x256xi32>
    %c0_i32_38 = arith.constant 0 : i32
    %122 = vector.broadcast %c0_i32_38 : i32 to vector<1x256xi32>
    %123 = arith.cmpi sge, %121, %122 : vector<1x256xi32>
    %c-2_i32_39 = arith.constant -2 : i32
    %124 = vector.broadcast %c-2_i32_39 : i32 to vector<1x256xi32>
    %125 = arith.addi %50, %124 : vector<1x256xi32>
    %c128_i32_40 = arith.constant 128 : i32
    %126 = vector.broadcast %c128_i32_40 : i32 to vector<1x256xi32>
    %127 = arith.cmpi slt, %125, %126 : vector<1x256xi32>
    %128 = arith.andi %123, %127 : vector<1x256xi1>
    %cst_41 = arith.constant 0.000000e+00 : f32
    %129 = vector.shape_cast %128 : vector<1x256xi1> to vector<1x256xi1>
    %130 = vector.broadcast %129 : vector<1x256xi1> to vector<32x256xi1>
    %131 = vector.broadcast %cst_41 : f32 to vector<32x256xf32>
    %132 = arith.select %130, %119, %131 : vector<32x256xi1>, vector<32x256xf32>
    %133 = arith.truncf %132 : vector<32x256xf32> to vector<32x256xbf16>
    %134 = arith.truncf %114 : vector<32x256xf32> to vector<32x256xbf16>
    %135 = vector.extract_strided_slice %114 {offsets = [0, 2], sizes = [32, 254], strides = [1, 1]} : vector<32x256xf32> to vector<32x254xf32>
    %136 = vector.extract_strided_slice %114 {offsets = [0, 0], sizes = [32, 2], strides = [1, 1]} : vector<32x256xf32> to vector<32x2xf32>
    %137 = tpu.concatenate %135, %136 in 1 : vector<32x254xf32>, vector<32x2xf32> -> vector<32x256xf32>
    %c2_i32 = arith.constant 2 : i32
    %138 = vector.broadcast %c2_i32 : i32 to vector<1x256xi32>
    %139 = arith.addi %50, %138 : vector<1x256xi32>
    %c0_i32_42 = arith.constant 0 : i32
    %140 = vector.broadcast %c0_i32_42 : i32 to vector<1x256xi32>
    %141 = arith.cmpi sge, %139, %140 : vector<1x256xi32>
    %c2_i32_43 = arith.constant 2 : i32
    %142 = vector.broadcast %c2_i32_43 : i32 to vector<1x256xi32>
    %143 = arith.addi %50, %142 : vector<1x256xi32>
    %c128_i32_44 = arith.constant 128 : i32
    %144 = vector.broadcast %c128_i32_44 : i32 to vector<1x256xi32>
    %145 = arith.cmpi slt, %143, %144 : vector<1x256xi32>
    %146 = arith.andi %141, %145 : vector<1x256xi1>
    %cst_45 = arith.constant 0.000000e+00 : f32
    %147 = vector.shape_cast %146 : vector<1x256xi1> to vector<1x256xi1>
    %148 = vector.broadcast %147 : vector<1x256xi1> to vector<32x256xi1>
    %149 = vector.broadcast %cst_45 : f32 to vector<32x256xf32>
    %150 = arith.select %148, %137, %149 : vector<32x256xi1>, vector<32x256xf32>
    %151 = arith.truncf %150 : vector<32x256xf32> to vector<32x256xbf16>
    %152 = tpu.concatenate %133, %134, %151 in 0 : vector<32x256xbf16>, vector<32x256xbf16>, vector<32x256xbf16> -> vector<96x256xbf16>
    %c1_46 = arith.constant 1 : index
    %c0_47 = arith.constant 0 : index
    %c0_48 = arith.constant 0 : index
    %153 = vector.load %arg5[%c1_46, %c0_47, %c0_48] : memref<3x64x96xbf16, #tpu.memory_space<vmem>>, vector<1x64x96xbf16>
    %154 = vector.shape_cast %153 : vector<1x64x96xbf16> to vector<64x96xbf16>
    %cst_49 = arith.constant dense<0.000000e+00> : vector<64x256xf32>
    %155 = tpu.matmul %154, %152, %cst_49 {dimension_numbers = #tpu.dot_dimension_numbers<[1], [0], [0], [1], [0, 0, 1, 1], [], []>} : vector<64x96xbf16>, vector<96x256xbf16>, vector<64x256xf32> -> vector<64x256xf32>
    %c1_50 = arith.constant 1 : index
    %c0_51 = arith.constant 0 : index
    %c0_52 = arith.constant 0 : index
    %156 = vector.load %arg6[%c1_50, %c0_51, %c0_52] : memref<3x64x1xf32, #tpu.memory_space<vmem>>, vector<1x64x1xf32>
    %157 = vector.shape_cast %156 : vector<1x64x1xf32> to vector<64x1xf32>
    %158 = vector.broadcast %157 : vector<64x1xf32> to vector<64x256xf32>
    %159 = arith.addf %155, %158 : vector<64x256xf32>
    %160 = vector.extract_strided_slice %159 {offsets = [0, 0], sizes = [32, 256], strides = [1, 1]} : vector<64x256xf32> to vector<32x256xf32>
    %161 = math.tanh %160 : vector<32x256xf32>
    %162 = vector.extract_strided_slice %159 {offsets = [32, 0], sizes = [32, 256], strides = [1, 1]} : vector<64x256xf32> to vector<32x256xf32>
    %163 = arith.negf %162 : vector<32x256xf32>
    %164 = math.exp %163 : vector<32x256xf32>
    %cst_53 = arith.constant 1.000000e+00 : f32
    %165 = vector.broadcast %cst_53 : f32 to vector<32x256xf32>
    %166 = arith.addf %165, %164 : vector<32x256xf32>
    %167 = arith.divf %165, %166 : vector<32x256xf32>
    %168 = arith.mulf %161, %167 : vector<32x256xf32>
    %169 = arith.truncf %168 : vector<32x256xf32> to vector<32x256xbf16>
    %c1_54 = arith.constant 1 : index
    %c0_55 = arith.constant 0 : index
    %c0_56 = arith.constant 0 : index
    %170 = vector.load %arg7[%c1_54, %c0_55, %c0_56] : memref<3x64x32xbf16, #tpu.memory_space<vmem>>, vector<1x64x32xbf16>
    %171 = vector.shape_cast %170 : vector<1x64x32xbf16> to vector<64x32xbf16>
    %cst_57 = arith.constant dense<0.000000e+00> : vector<64x256xf32>
    %172 = tpu.matmul %171, %169, %cst_57 {dimension_numbers = #tpu.dot_dimension_numbers<[1], [0], [0], [1], [0, 0, 1, 1], [], []>} : vector<64x32xbf16>, vector<32x256xbf16>, vector<64x256xf32> -> vector<64x256xf32>
    %c1_58 = arith.constant 1 : index
    %c0_59 = arith.constant 0 : index
    %c0_60 = arith.constant 0 : index
    %173 = vector.load %arg8[%c1_58, %c0_59, %c0_60] : memref<3x64x1xf32, #tpu.memory_space<vmem>>, vector<1x64x1xf32>
    %174 = vector.shape_cast %173 : vector<1x64x1xf32> to vector<64x1xf32>
    %175 = vector.broadcast %174 : vector<64x1xf32> to vector<64x256xf32>
    %176 = arith.addf %172, %175 : vector<64x256xf32>
    %177 = vector.extract_strided_slice %176 {offsets = [0, 0], sizes = [32, 256], strides = [1, 1]} : vector<64x256xf32> to vector<32x256xf32>
    %178 = arith.addf %114, %177 : vector<32x256xf32>
    %179 = vector.broadcast %15 : vector<1x256xf32> to vector<32x256xf32>
    %180 = arith.mulf %178, %179 : vector<32x256xf32>
    %181 = vector.extract_strided_slice %176 {offsets = [32, 0], sizes = [32, 256], strides = [1, 1]} : vector<64x256xf32> to vector<32x256xf32>
    %182 = arith.addf %116, %181 : vector<32x256xf32>
    %183 = vector.extract_strided_slice %180 {offsets = [0, 252], sizes = [32, 4], strides = [1, 1]} : vector<32x256xf32> to vector<32x4xf32>
    %184 = vector.extract_strided_slice %180 {offsets = [0, 0], sizes = [32, 252], strides = [1, 1]} : vector<32x256xf32> to vector<32x252xf32>
    %185 = tpu.concatenate %183, %184 in 1 : vector<32x4xf32>, vector<32x252xf32> -> vector<32x256xf32>
    %c-4_i32 = arith.constant -4 : i32
    %186 = vector.broadcast %c-4_i32 : i32 to vector<1x256xi32>
    %187 = arith.addi %50, %186 : vector<1x256xi32>
    %c0_i32_61 = arith.constant 0 : i32
    %188 = vector.broadcast %c0_i32_61 : i32 to vector<1x256xi32>
    %189 = arith.cmpi sge, %187, %188 : vector<1x256xi32>
    %c-4_i32_62 = arith.constant -4 : i32
    %190 = vector.broadcast %c-4_i32_62 : i32 to vector<1x256xi32>
    %191 = arith.addi %50, %190 : vector<1x256xi32>
    %c128_i32_63 = arith.constant 128 : i32
    %192 = vector.broadcast %c128_i32_63 : i32 to vector<1x256xi32>
    %193 = arith.cmpi slt, %191, %192 : vector<1x256xi32>
    %194 = arith.andi %189, %193 : vector<1x256xi1>
    %cst_64 = arith.constant 0.000000e+00 : f32
    %195 = vector.shape_cast %194 : vector<1x256xi1> to vector<1x256xi1>
    %196 = vector.broadcast %195 : vector<1x256xi1> to vector<32x256xi1>
    %197 = vector.broadcast %cst_64 : f32 to vector<32x256xf32>
    %198 = arith.select %196, %185, %197 : vector<32x256xi1>, vector<32x256xf32>
    %199 = arith.truncf %198 : vector<32x256xf32> to vector<32x256xbf16>
    %200 = arith.truncf %180 : vector<32x256xf32> to vector<32x256xbf16>
    %201 = vector.extract_strided_slice %180 {offsets = [0, 4], sizes = [32, 252], strides = [1, 1]} : vector<32x256xf32> to vector<32x252xf32>
    %202 = vector.extract_strided_slice %180 {offsets = [0, 0], sizes = [32, 4], strides = [1, 1]} : vector<32x256xf32> to vector<32x4xf32>
    %203 = tpu.concatenate %201, %202 in 1 : vector<32x252xf32>, vector<32x4xf32> -> vector<32x256xf32>
    %c4_i32 = arith.constant 4 : i32
    %204 = vector.broadcast %c4_i32 : i32 to vector<1x256xi32>
    %205 = arith.addi %50, %204 : vector<1x256xi32>
    %c0_i32_65 = arith.constant 0 : i32
    %206 = vector.broadcast %c0_i32_65 : i32 to vector<1x256xi32>
    %207 = arith.cmpi sge, %205, %206 : vector<1x256xi32>
    %c4_i32_66 = arith.constant 4 : i32
    %208 = vector.broadcast %c4_i32_66 : i32 to vector<1x256xi32>
    %209 = arith.addi %50, %208 : vector<1x256xi32>
    %c128_i32_67 = arith.constant 128 : i32
    %210 = vector.broadcast %c128_i32_67 : i32 to vector<1x256xi32>
    %211 = arith.cmpi slt, %209, %210 : vector<1x256xi32>
    %212 = arith.andi %207, %211 : vector<1x256xi1>
    %cst_68 = arith.constant 0.000000e+00 : f32
    %213 = vector.shape_cast %212 : vector<1x256xi1> to vector<1x256xi1>
    %214 = vector.broadcast %213 : vector<1x256xi1> to vector<32x256xi1>
    %215 = vector.broadcast %cst_68 : f32 to vector<32x256xf32>
    %216 = arith.select %214, %203, %215 : vector<32x256xi1>, vector<32x256xf32>
    %217 = arith.truncf %216 : vector<32x256xf32> to vector<32x256xbf16>
    %218 = tpu.concatenate %199, %200, %217 in 0 : vector<32x256xbf16>, vector<32x256xbf16>, vector<32x256xbf16> -> vector<96x256xbf16>
    %c2 = arith.constant 2 : index
    %c0_69 = arith.constant 0 : index
    %c0_70 = arith.constant 0 : index
    %219 = vector.load %arg5[%c2, %c0_69, %c0_70] : memref<3x64x96xbf16, #tpu.memory_space<vmem>>, vector<1x64x96xbf16>
    %220 = vector.shape_cast %219 : vector<1x64x96xbf16> to vector<64x96xbf16>
    %cst_71 = arith.constant dense<0.000000e+00> : vector<64x256xf32>
    %221 = tpu.matmul %220, %218, %cst_71 {dimension_numbers = #tpu.dot_dimension_numbers<[1], [0], [0], [1], [0, 0, 1, 1], [], []>} : vector<64x96xbf16>, vector<96x256xbf16>, vector<64x256xf32> -> vector<64x256xf32>
    %c2_72 = arith.constant 2 : index
    %c0_73 = arith.constant 0 : index
    %c0_74 = arith.constant 0 : index
    %222 = vector.load %arg6[%c2_72, %c0_73, %c0_74] : memref<3x64x1xf32, #tpu.memory_space<vmem>>, vector<1x64x1xf32>
    %223 = vector.shape_cast %222 : vector<1x64x1xf32> to vector<64x1xf32>
    %224 = vector.broadcast %223 : vector<64x1xf32> to vector<64x256xf32>
    %225 = arith.addf %221, %224 : vector<64x256xf32>
    %226 = vector.extract_strided_slice %225 {offsets = [0, 0], sizes = [32, 256], strides = [1, 1]} : vector<64x256xf32> to vector<32x256xf32>
    %227 = math.tanh %226 : vector<32x256xf32>
    %228 = vector.extract_strided_slice %225 {offsets = [32, 0], sizes = [32, 256], strides = [1, 1]} : vector<64x256xf32> to vector<32x256xf32>
    %229 = arith.negf %228 : vector<32x256xf32>
    %230 = math.exp %229 : vector<32x256xf32>
    %cst_75 = arith.constant 1.000000e+00 : f32
    %231 = vector.broadcast %cst_75 : f32 to vector<32x256xf32>
    %232 = arith.addf %231, %230 : vector<32x256xf32>
    %233 = arith.divf %231, %232 : vector<32x256xf32>
    %234 = arith.mulf %227, %233 : vector<32x256xf32>
    %235 = arith.truncf %234 : vector<32x256xf32> to vector<32x256xbf16>
    %c2_76 = arith.constant 2 : index
    %c0_77 = arith.constant 0 : index
    %c0_78 = arith.constant 0 : index
    %236 = vector.load %arg7[%c2_76, %c0_77, %c0_78] : memref<3x64x32xbf16, #tpu.memory_space<vmem>>, vector<1x64x32xbf16>
    %237 = vector.shape_cast %236 : vector<1x64x32xbf16> to vector<64x32xbf16>
    %238 = vector.extract_strided_slice %237 {offsets = [32, 0], sizes = [32, 32], strides = [1, 1]} : vector<64x32xbf16> to vector<32x32xbf16>
    %cst_79 = arith.constant dense<0.000000e+00> : vector<32x256xf32>
    %239 = tpu.matmul %238, %235, %cst_79 {dimension_numbers = #tpu.dot_dimension_numbers<[1], [0], [0], [1], [0, 0, 1, 1], [], []>} : vector<32x32xbf16>, vector<32x256xbf16>, vector<32x256xf32> -> vector<32x256xf32>
    %c2_80 = arith.constant 2 : index
    %c0_81 = arith.constant 0 : index
    %c0_82 = arith.constant 0 : index
    %240 = vector.load %arg8[%c2_80, %c0_81, %c0_82] : memref<3x64x1xf32, #tpu.memory_space<vmem>>, vector<1x64x1xf32>
    %241 = vector.shape_cast %240 : vector<1x64x1xf32> to vector<64x1xf32>
    %242 = vector.extract_strided_slice %241 {offsets = [32, 0], sizes = [32, 1], strides = [1, 1]} : vector<64x1xf32> to vector<32x1xf32>
    %243 = vector.broadcast %242 : vector<32x1xf32> to vector<32x256xf32>
    %244 = arith.addf %239, %243 : vector<32x256xf32>
    %245 = arith.addf %182, %244 : vector<32x256xf32>
    %246 = vector.broadcast %15 : vector<1x256xf32> to vector<32x256xf32>
    %247 = arith.mulf %245, %246 : vector<32x256xf32>
    %c0_83 = arith.constant 0 : index
    %c0_84 = arith.constant 0 : index
    %248 = vector.load %arg9[%c0_83, %c0_84] : memref<4x32xf32, #tpu.memory_space<vmem>>, vector<4x32xf32>
    %cst_85 = arith.constant dense<0.000000e+00> : vector<4x256xf32>
    %249 = tpu.matmul %248, %247, %cst_85 {dimension_numbers = #tpu.dot_dimension_numbers<[1], [0], [0], [1], [0, 0, 1, 1], [], []>} : vector<4x32xf32>, vector<32x256xf32>, vector<4x256xf32> -> vector<4x256xf32>
    %c0_86 = arith.constant 0 : index
    %c0_87 = arith.constant 0 : index
    %250 = vector.load %arg10[%c0_86, %c0_87] : memref<4x1xf32, #tpu.memory_space<vmem>>, vector<4x1xf32>
    %251 = vector.broadcast %250 : vector<4x1xf32> to vector<4x256xf32>
    %252 = arith.addf %249, %251 : vector<4x256xf32>
    %253 = vector.extract_strided_slice %252 {offsets = [0, 0], sizes = [2, 256], strides = [1, 1]} : vector<4x256xf32> to vector<2x256xf32>
    %254 = vector.extract_strided_slice %252 {offsets = [2, 0], sizes = [2, 256], strides = [1, 1]} : vector<4x256xf32> to vector<2x256xf32>
    %255 = math.exp %254 : vector<2x256xf32>
    %256 = arith.mulf %5, %255 : vector<2x256xf32>
    %257 = arith.addf %256, %253 : vector<2x256xf32>
    %258 = vector.broadcast %15 : vector<1x256xf32> to vector<2x256xf32>
    %259 = arith.mulf %257, %258 : vector<2x256xf32>
    %260 = vector.broadcast %15 : vector<1x256xf32> to vector<2x256xf32>
    %261 = arith.mulf %254, %260 : vector<2x256xf32>
    %262 = vector.extract_strided_slice %259 {offsets = [0, 0], sizes = [2, 128], strides = [1, 1]} : vector<2x256xf32> to vector<2x128xf32>
    %263 = vector.extract_strided_slice %0 {offsets = [0, 2, 0], sizes = [1, 2, 128], strides = [1, 1, 1]} : vector<2x4x128xf32> to vector<1x2x128xf32>
    %264 = vector.shape_cast %263 : vector<1x2x128xf32> to vector<2x128xf32>
    %265 = tpu.concatenate %262, %264 in 0 : vector<2x128xf32>, vector<2x128xf32> -> vector<4x128xf32>
    %c0_88 = arith.constant 0 : index
    %c0_89 = arith.constant 0 : index
    %c0_90 = arith.constant 0 : index
    %266 = vector.load %arg11[%c0_88, %c0_89, %c0_90] : memref<2x4x128xf32, #tpu.memory_space<vmem>>, vector<1x4x128xf32>
    %267 = vector.shape_cast %266 : vector<1x4x128xf32> to vector<4x128xf32>
    %268 = vector.shape_cast %265 : vector<4x128xf32> to vector<1x4x128xf32>
    tpu.vector_store %arg11[%c0_88, %c0_89, %c0_90], %268 {strides = array<i32>} : memref<2x4x128xf32, #tpu.memory_space<vmem>>, vector<1x4x128xf32>,
    %269 = vector.extract_strided_slice %261 {offsets = [0, 0], sizes = [2, 128], strides = [1, 1]} : vector<2x256xf32> to vector<2x128xf32>
    %cst_91 = arith.constant dense<0.000000e+00> : vector<2xf32>
    %270 = vector.multi_reduction <add>, %269, %cst_91 [1] : vector<2x128xf32> to vector<2xf32>
    %271 = vector.shape_cast %270 : vector<2xf32> to vector<2x1xf32>
    %cst_92 = arith.constant dense<0.000000e+00> : vector<1xf32>
    %272 = vector.multi_reduction <add>, %271, %cst_92 [0] : vector<2x1xf32> to vector<1xf32>
    %273 = vector.shape_cast %272 : vector<1xf32> to vector<1x1xf32>
    %274 = vector.shape_cast %273 : vector<1x1xf32> to vector<1x1xf32>
    %275 = vector.broadcast %274 : vector<1x1xf32> to vector<1x128xf32>
    %276 = vector.extract_strided_slice %259 {offsets = [0, 128], sizes = [2, 128], strides = [1, 1]} : vector<2x256xf32> to vector<2x128xf32>
    %277 = vector.extract_strided_slice %0 {offsets = [1, 2, 0], sizes = [1, 2, 128], strides = [1, 1, 1]} : vector<2x4x128xf32> to vector<1x2x128xf32>
    %278 = vector.shape_cast %277 : vector<1x2x128xf32> to vector<2x128xf32>
    %279 = tpu.concatenate %276, %278 in 0 : vector<2x128xf32>, vector<2x128xf32> -> vector<4x128xf32>
    %c1_93 = arith.constant 1 : index
    %c0_94 = arith.constant 0 : index
    %c0_95 = arith.constant 0 : index
    %280 = vector.load %arg11[%c1_93, %c0_94, %c0_95] : memref<2x4x128xf32, #tpu.memory_space<vmem>>, vector<1x4x128xf32>
    %281 = vector.shape_cast %280 : vector<1x4x128xf32> to vector<4x128xf32>
    %282 = vector.shape_cast %279 : vector<4x128xf32> to vector<1x4x128xf32>
    tpu.vector_store %arg11[%c1_93, %c0_94, %c0_95], %282 {strides = array<i32>} : memref<2x4x128xf32, #tpu.memory_space<vmem>>, vector<1x4x128xf32>,
    %283 = vector.extract_strided_slice %261 {offsets = [0, 128], sizes = [2, 128], strides = [1, 1]} : vector<2x256xf32> to vector<2x128xf32>
    %cst_96 = arith.constant dense<0.000000e+00> : vector<2xf32>
    %284 = vector.multi_reduction <add>, %283, %cst_96 [1] : vector<2x128xf32> to vector<2xf32>
    %285 = vector.shape_cast %284 : vector<2xf32> to vector<2x1xf32>
    %cst_97 = arith.constant dense<0.000000e+00> : vector<1xf32>
    %286 = vector.multi_reduction <add>, %285, %cst_97 [0] : vector<2x1xf32> to vector<1xf32>
    %287 = vector.shape_cast %286 : vector<1xf32> to vector<1x1xf32>
    %288 = vector.shape_cast %287 : vector<1x1xf32> to vector<1x1xf32>
    %289 = vector.broadcast %288 : vector<1x1xf32> to vector<1x128xf32>
    %290 = tpu.concatenate %275, %289 in 0 : vector<1x128xf32>, vector<1x128xf32> -> vector<2x128xf32>
    %c0_98 = arith.constant 0 : index
    %c0_99 = arith.constant 0 : index
    %291 = vector.load %arg12[%c0_98, %c0_99] : memref<2x128xf32, #tpu.memory_space<vmem>>, vector<2x128xf32>
    tpu.vector_store %arg12[%c0_98, %c0_99], %290 {strides = array<i32>} : memref<2x128xf32, #tpu.memory_space<vmem>>, vector<2x128xf32>,
    return
  }
  func.func @transform_0(%arg0: i32) -> (i32, i32, i32) {
    %c0_i32 = arith.constant 0 : i32
    %c0_i32_0 = arith.constant 0 : i32
    %c0_i32_1 = arith.constant 0 : i32
    %c0_i32_2 = arith.constant 0 : i32
    return %c0_i32, %c0_i32_0, %c0_i32_1 : i32, i32, i32
  }
  func.func @transform_1(%arg0: i32) -> (i32, i32, i32) {
    %c0_i32 = arith.constant 0 : i32
    %c0_i32_0 = arith.constant 0 : i32
    %c0_i32_1 = arith.constant 0 : i32
    %c0_i32_2 = arith.constant 0 : i32
    return %c0_i32, %c0_i32_0, %c0_i32_1 : i32, i32, i32
  }
  func.func @transform_2(%arg0: i32) -> (i32, i32) {
    %c0_i32 = arith.constant 0 : i32
    %c0_i32_0 = arith.constant 0 : i32
    %c0_i32_1 = arith.constant 0 : i32
    return %c0_i32, %c0_i32_0 : i32, i32
  }
  func.func @transform_3(%arg0: i32) -> (i32, i32) {
    %c0_i32 = arith.constant 0 : i32
    %c0_i32_0 = arith.constant 0 : i32
    %c0_i32_1 = arith.constant 0 : i32
    return %c0_i32, %c0_i32_0 : i32, i32
  }
  func.func @transform_4(%arg0: i32) -> (i32, i32, i32) {
    %c0_i32 = arith.constant 0 : i32
    %c0_i32_0 = arith.constant 0 : i32
    %c0_i32_1 = arith.constant 0 : i32
    %c0_i32_2 = arith.constant 0 : i32
    return %c0_i32, %c0_i32_0, %c0_i32_1 : i32, i32, i32
  }
  func.func @transform_5(%arg0: i32) -> (i32, i32, i32) {
    %c0_i32 = arith.constant 0 : i32
    %c0_i32_0 = arith.constant 0 : i32
    %c0_i32_1 = arith.constant 0 : i32
    %c0_i32_2 = arith.constant 0 : i32
    return %c0_i32, %c0_i32_0, %c0_i32_1 : i32, i32, i32
  }
  func.func @transform_6(%arg0: i32) -> (i32, i32, i32) {
    %c0_i32 = arith.constant 0 : i32
    %c0_i32_0 = arith.constant 0 : i32
    %c0_i32_1 = arith.constant 0 : i32
    %c0_i32_2 = arith.constant 0 : i32
    return %c0_i32, %c0_i32_0, %c0_i32_1 : i32, i32, i32
  }
  func.func @transform_7(%arg0: i32) -> (i32, i32, i32) {
    %c0_i32 = arith.constant 0 : i32
    %c0_i32_0 = arith.constant 0 : i32
    %c0_i32_1 = arith.constant 0 : i32
    %c0_i32_2 = arith.constant 0 : i32
    return %c0_i32, %c0_i32_0, %c0_i32_1 : i32, i32, i32
  }
  func.func @transform_8(%arg0: i32) -> (i32, i32) {
    %c0_i32 = arith.constant 0 : i32
    %c0_i32_0 = arith.constant 0 : i32
    %c0_i32_1 = arith.constant 0 : i32
    return %c0_i32, %c0_i32_0 : i32, i32
  }
  func.func @transform_9(%arg0: i32) -> (i32, i32) {
    %c0_i32 = arith.constant 0 : i32
    %c0_i32_0 = arith.constant 0 : i32
    %c0_i32_1 = arith.constant 0 : i32
    return %c0_i32, %c0_i32_0 : i32, i32
  }
  func.func @transform_10(%arg0: i32) -> (i32, i32, i32) {
    %c0_i32 = arith.constant 0 : i32
    %c0_i32_0 = arith.constant 0 : i32
    %c0_i32_1 = arith.constant 0 : i32
    %c0_i32_2 = arith.constant 0 : i32
    return %c0_i32, %c0_i32_0, %c0_i32_1 : i32, i32, i32
  }
  func.func @transform_11(%arg0: i32) -> (i32, i32) {
    %c0_i32 = arith.constant 0 : i32
    %c0_i32_0 = arith.constant 0 : i32
    %c0_i32_1 = arith.constant 0 : i32
    return %c0_i32, %c0_i32_0 : i32, i32
  }
}

</mosaic_0001>

<llo_original>
// kernel: tpu_custom_call.1
$region0: #{tpu_custom_call.1}
  #allocation0 [shape = 'u32[]', space=smem, size = 0x4, offset = 0x4, fixed_abs, tag = 'smem constant byte address 0x4 - core index']
  #allocation1 [shape = 'u32[144,128]{1,0:T(1,128)}', space=vmem, size = 0x12000, scoped, tag = 'internal scratch']
  %s0 = inlined_call_operand.vmem [shape: f32[2,4,128], index: 0, kind: input, shape index: {}]
  %s1 = inlined_call_operand.vmem [shape: f32[2,1,128], index: 1, kind: input, shape index: {}]
  %s2 = inlined_call_operand.vmem [shape: f32[32,2], index: 2, kind: input, shape index: {}]
  %s3 = inlined_call_operand.vmem [shape: f32[32,1], index: 3, kind: input, shape index: {}]
  %s4 = inlined_call_operand.vmem [shape: bf16[3,64,96], index: 4, kind: input, shape index: {}]
  %s5 = inlined_call_operand.vmem [shape: f32[3,64,1], index: 5, kind: input, shape index: {}]
  %s6 = inlined_call_operand.vmem [shape: bf16[3,64,32], index: 6, kind: input, shape index: {}]
  %s7 = inlined_call_operand.vmem [shape: f32[3,64,1], index: 7, kind: input, shape index: {}]
  %s8 = inlined_call_operand.vmem [shape: f32[4,32], index: 8, kind: input, shape index: {}]
  %s9 = inlined_call_operand.vmem [shape: f32[4,1], index: 9, kind: input, shape index: {}]
  %s10 = inlined_call_operand.hbm [shape: f32[2,4,128], index: 10, kind: output, shape index: {0}]
  %s11 = inlined_call_operand.hbm [shape: f32[2,128], index: 11, kind: output, shape index: {1}]
  %12 = xla_tuple %s10, %s11
  %s13 = sld [smem:[#allocation0]]
  $region58: #{tpu_custom_call.1} parent=0
    _
  %s15 = ssub.s32 1, %s13
  %s16 = scalar_select 0, %s15, %s13
  $region1: #{tpu_custom_call.1} parent=0
    #allocation2 [shape = 'u8[4096]{0}', space=vmem, size = 0x1000, scoped, tag = 'output window, operand 0, single buffered']
    #allocation3 [shape = 's32[1]{0}', space=sflag, size = 0x4, scoped, tag = 'scoped memory for tpu_custom_call.1']
    #allocation4 [shape = 'u8[1024]{0}', space=vmem, size = 0x400, scoped, tag = 'output window, operand 1, single buffered']
    #allocation5 [shape = 's32[1]{0}', space=sflag, size = 0x4, scoped, tag = 'scoped memory for tpu_custom_call.1']
    %17 = vsyncpa [#allocation3], 0
    %18 = vsyncpa [#allocation5], 0
    // Predicated region
    $region2: #{tpu_custom_call.1} parent=1 // pred_check
      _
    $region3: #{tpu_custom_call.1} parent=1 // pred_check_branch
      %20 = sbr.rel (0) target = $region5
    $region4: #{tpu_custom_call.1} parent=1 // pred_region
      _
    $region5: #{tpu_custom_call.1} parent=1 // pred_fallthru
      _
    // Predicated region
    $region6: #{tpu_custom_call.1} parent=1 // pred_check
      _
    $region7: #{tpu_custom_call.1} parent=1 // pred_check_branch
      %22 = sbr.rel (0) target = $region9
    $region8: #{tpu_custom_call.1} parent=1 // pred_region
      _
    $region9: #{tpu_custom_call.1} parent=1 // pred_fallthru
      _
    // Predicated region
    $region10: #{tpu_custom_call.1} parent=1 // pred_check
      _
    $region11: #{tpu_custom_call.1} parent=1 // pred_check_branch
      %24 = sbr.rel (0) target = $region13
    $region12: #{tpu_custom_call.1} parent=1 // pred_region
      _
    $region13: #{tpu_custom_call.1} parent=1 // pred_fallthru
      _
    // Predicated region
    $region14: #{tpu_custom_call.1} parent=1 // pred_check
      _
    $region15: #{tpu_custom_call.1} parent=1 // pred_check_branch
      %26 = sbr.rel (0) target = $region17
    $region16: #{tpu_custom_call.1} parent=1 // pred_region
      _
    $region17: #{tpu_custom_call.1} parent=1 // pred_fallthru
      _
    // Predicated region
    $region18: #{tpu_custom_call.1} parent=1 // pred_check
      _
    $region19: #{tpu_custom_call.1} parent=1 // pred_check_branch
      %28 = sbr.rel (0) target = $region21
    $region20: #{tpu_custom_call.1} parent=1 // pred_region
      _
    $region21: #{tpu_custom_call.1} parent=1 // pred_fallthru
      _
    // Predicated region
    $region22: #{tpu_custom_call.1} parent=1 // pred_check
      _
    $region23: #{tpu_custom_call.1} parent=1 // pred_check_branch
      %30 = sbr.rel (0) target = $region25
    $region24: #{tpu_custom_call.1} parent=1 // pred_region
      _
    $region25: #{tpu_custom_call.1} parent=1 // pred_fallthru
      _
    // Predicated region
    $region26: #{tpu_custom_call.1} parent=1 // pred_check
      _
    $region27: #{tpu_custom_call.1} parent=1 // pred_check_branch
      %32 = sbr.rel (0) target = $region29
    $region28: #{tpu_custom_call.1} parent=1 // pred_region
      _
    $region29: #{tpu_custom_call.1} parent=1 // pred_fallthru
      _
    // Predicated region
    $region30: #{tpu_custom_call.1} parent=1 // pred_check
      _
    $region31: #{tpu_custom_call.1} parent=1 // pred_check_branch
      %34 = sbr.rel (0) target = $region33
    $region32: #{tpu_custom_call.1} parent=1 // pred_region
      _
    $region33: #{tpu_custom_call.1} parent=1 // pred_fallthru
      _
    // Predicated region
    $region34: #{tpu_custom_call.1} parent=1 // pred_check
      _
    $region35: #{tpu_custom_call.1} parent=1 // pred_check_branch
      %36 = sbr.rel (0) target = $region37
    $region36: #{tpu_custom_call.1} parent=1 // pred_region
      _
    $region37: #{tpu_custom_call.1} parent=1 // pred_fallthru
      _
    // Predicated region
    $region38: #{tpu_custom_call.1} parent=1 // pred_check
      _
    $region39: #{tpu_custom_call.1} parent=1 // pred_check_branch
      %38 = sbr.rel (0) target = $region41
    $region40: #{tpu_custom_call.1} parent=1 // pred_region
      _
    $region41: #{tpu_custom_call.1} parent=1 // pred_fallthru
      _
    %v40 = vld [vmem:[%s0] sm:$0xf]
    %v41 = vld [vmem:[%s0 + $0x4] sm:$0xf]
    %v42 = vld [vmem:[%s1] sm:$0x1]
    %s43 = scalar_lea.vmem %s1, 1
    %v44 = vld [vmem:[%s43] sm:$0x1]
    %v45 = vld [vmem:[%s2] sm:$0xff]
    %v46 = vld [vmem:[%s2 + $0x8] sm:$0xff]
    %v47 = vld [vmem:[%s2 + $0x10] sm:$0xff]
    %v48 = vld [vmem:[%s2 + $0x18] sm:$0xff]
    %50 = vset.pattern.permute.xlu0 0
    %51 = vperm.xlu0 %50, %v45
    %v52 = vpop.permute.xlu0 %51
    %55 = vset.pattern.permute.xlu0 0
    %56 = vperm.xlu0 %55, %v46
    %v57 = vpop.permute.xlu0 %56
    %60 = vset.pattern.permute.xlu0 0
    %61 = vperm.xlu0 %60, %v47
    %v62 = vpop.permute.xlu0 %61
    %65 = vset.pattern.permute.xlu0 0
    %66 = vperm.xlu0 %65, %v48
    %v67 = vpop.permute.xlu0 %66
    %v69 = vlaneseq
    %v70 = vshrl.u32 %v69, 7
    %v71 = vsub.s32 2, %v70
    %v72 = vrot.slane %v40, %v71
    %v73 = vlaneseq
    %v74 = vshrl.u32 %v73, 7
    %v75 = vsub.s32 2, %v74
    %v76 = vrot.slane %v41, %v75
    %v77 = vmul.f32 %v52, %v72
    %v78 = vmul.f32 %v52, %v76
    %v79 = vmul.f32 %v57, %v72
    %v80 = vmul.f32 %v57, %v76
    %v81 = vmul.f32 %v62, %v72
    %v82 = vmul.f32 %v62, %v76
    %v83 = vmul.f32 %v67, %v72
    %v84 = vmul.f32 %v67, %v76
    %85 = vset.pattern.permute.xlu0 1
    %86 = vperm.xlu0 %85, %v45
    %v87 = vpop.permute.xlu0 %86
    %89 = vset.pattern.permute.xlu0 1
    %90 = vperm.xlu0 %89, %v46
    %v91 = vpop.permute.xlu0 %90
    %93 = vset.pattern.permute.xlu0 1
    %94 = vperm.xlu0 %93, %v47
    %v95 = vpop.permute.xlu0 %94
    %97 = vset.pattern.permute.xlu0 1
    %98 = vperm.xlu0 %97, %v48
    %v99 = vpop.permute.xlu0 %98
    %v101 = vlaneseq
    %v102 = vshrl.u32 %v101, 7
    %v103 = vsub.s32 3, %v102
    %v104 = vrot.slane %v40, %v103
    %v105 = vlaneseq
    %v106 = vshrl.u32 %v105, 7
    %v107 = vsub.s32 3, %v106
    %v108 = vrot.slane %v41, %v107
    %v109 = vmul.f32 %v87, %v104
    %v110 = vmul.f32 %v87, %v108
    %v111 = vmul.f32 %v91, %v104
    %v112 = vmul.f32 %v91, %v108
    %v113 = vmul.f32 %v95, %v104
    %v114 = vmul.f32 %v95, %v108
    %v115 = vmul.f32 %v99, %v104
    %v116 = vmul.f32 %v99, %v108
    %v117 = vadd.f32 %v77, %v109
    %v118 = vadd.f32 %v78, %v110
    %v119 = vadd.f32 %v79, %v111
    %v120 = vadd.f32 %v80, %v112
    %v121 = vadd.f32 %v81, %v113
    %v122 = vadd.f32 %v82, %v114
    %v123 = vadd.f32 %v83, %v115
    %v124 = vadd.f32 %v84, %v116
    %v125 = vld [vmem:[%s3] sm:$0xff]
    %v126 = vld [vmem:[%s3 + $0x8] sm:$0xff]
    %v127 = vld [vmem:[%s3 + $0x10] sm:$0xff]
    %v128 = vld [vmem:[%s3 + $0x18] sm:$0xff]
    %130 = vset.pattern.permute.xlu0 0
    %131 = vperm.xlu0 %130, %v125
    %v132 = vpop.permute.xlu0 %131
    %135 = vset.pattern.permute.xlu0 0
    %136 = vperm.xlu0 %135, %v126
    %v137 = vpop.permute.xlu0 %136
    %140 = vset.pattern.permute.xlu0 0
    %141 = vperm.xlu0 %140, %v127
    %v142 = vpop.permute.xlu0 %141
    %145 = vset.pattern.permute.xlu0 0
    %146 = vperm.xlu0 %145, %v128
    %v147 = vpop.permute.xlu0 %146
    %v149 = vadd.f32 %v117, %v132
    %v150 = vadd.f32 %v118, %v132
    %v151 = vadd.f32 %v119, %v137
    %v152 = vadd.f32 %v120, %v137
    %v153 = vadd.f32 %v121, %v142
    %v154 = vadd.f32 %v122, %v142
    %v155 = vadd.f32 %v123, %v147
    %v156 = vadd.f32 %v124, %v147
    %v157 = vlaneseq
    %v158 = vshrl.u32 %v157, 7
    %v159 = vsub.s32 0, %v158
    %v160 = vrot.slane %v42, %v159
    %v161 = vlaneseq
    %v162 = vshrl.u32 %v161, 7
    %v163 = vsub.s32 0, %v162
    %v164 = vrot.slane %v44, %v163
    %v165 = vmul.f32 %v149, %v160
    %v166 = vmul.f32 %v150, %v164
    %v167 = vmul.f32 %v151, %v160
    %v168 = vmul.f32 %v152, %v164
    %v169 = vmul.f32 %v153, %v160
    %v170 = vmul.f32 %v154, %v164
    %v171 = vmul.f32 %v155, %v160
    %v172 = vmul.f32 %v156, %v164
    %v173 = vlaneseq
    %v174 = vand.u32 %v173, 127
    %v175 = vadd.s32 %v174, 128
    %vm176 = vcmp.lt.s32.totalorder %v174, 0
    %v177 = vsub.s32 0, %v174
    %v178 = vsel %vm176, %v177, %v174
    %v179 = vshrl.u32 %v178, 7
    %v180 = vand.u32 %v178, 127
    %v181 = vsub.s32 0, %v180
    %v182 = vsel %vm176, %v181, %v180
    %vm183 = vcmp.lt.s32.totalorder %v175, 0
    %v184 = vsub.s32 0, %v175
    %v185 = vsel %vm183, %v184, %v175
    %v186 = vshrl.u32 %v185, 7
    %v187 = vand.u32 %v185, 127
    %v188 = vsub.s32 0, %v187
    %v189 = vsel %vm183, %v188, %v187
    %vm190 = vcmp.ne.s32.totalorder %v182, 0
    %vm191 = vcmp.ne.s32.totalorder %v189, 0
    %vm192 = vcmp.lt.s32.totalorder %v182, 0
    %vm193 = vcmp.lt.s32.totalorder %v189, 0
    %vm194 = vmand %vm192, %vm190
    %vm195 = vmand %vm193, %vm191
    %v196 = vadd.s32 %v182, 128
    %v197 = vadd.s32 %v189, 128
    %v198 = vsel %vm194, %v196, %v182
    %v199 = vsel %vm195, %v197, %v189
    %204 = vrot.lane.b32.xlu0 %v166, 1
    %v205 = vpop.permute.xlu0 %204
    %206 = vrot.lane.b32.xlu0 %v168, 1
    %v207 = vpop.permute.xlu0 %206
    %208 = vrot.lane.b32.xlu0 %v170, 1
    %v209 = vpop.permute.xlu0 %208
    %210 = vrot.lane.b32.xlu0 %v172, 1
    %v211 = vpop.permute.xlu0 %210
    %220 = vrot.lane.b32.xlu0 %v165, 1
    %v221 = vpop.permute.xlu0 %220
    %222 = vrot.lane.b32.xlu0 %v167, 1
    %v223 = vpop.permute.xlu0 %222
    %224 = vrot.lane.b32.xlu0 %v169, 1
    %v225 = vpop.permute.xlu0 %224
    %226 = vrot.lane.b32.xlu0 %v171, 1
    %v227 = vpop.permute.xlu0 %226
    %vm228 = vcmask 7168
    %v229 = vsel %vm228, %v221, %v205
    %v230 = vsel %vm228, %v223, %v207
    %v231 = vsel %vm228, %v225, %v209
    %v232 = vsel %vm228, %v227, %v211
    %v241 = vsel %vm228, %v205, %v221
    %v242 = vsel %vm228, %v207, %v223
    %v243 = vsel %vm228, %v209, %v225
    %v244 = vsel %vm228, %v211, %v227
    %v245 = vadd.s32 %v198, 4294967295
    %v246 = vadd.s32 %v199, 4294967295
    %vm247 = vcmp.ge.s32.totalorder %v245, 0
    %vm248 = vcmp.ge.s32.totalorder %v246, 0
    %vm249 = vcmp.lt.s32.totalorder %v245, 128
    %vm250 = vcmp.lt.s32.totalorder %v246, 128
    %vm251 = vmand %vm247, %vm249
    %vm252 = vmand %vm248, %vm250
    %v253 = vsel %vm251, 1, 0
    %v254 = vsel %vm252, 1, 0
    %vm255 = vcmp.eq.s32.totalorder %v253, 1
    %vm256 = vcmp.eq.s32.totalorder %v254, 1
    %v257 = vsel %vm255, %v241, 0.0
    %v258 = vsel %vm256, %v229, 0.0
    %v259 = vsel %vm255, %v242, 0.0
    %v260 = vsel %vm256, %v230, 0.0
    %v261 = vsel %vm255, %v243, 0.0
    %v262 = vsel %vm256, %v231, 0.0
    %v263 = vsel %vm255, %v244, 0.0
    %v264 = vsel %vm256, %v232, 0.0
    %v265 = vpack.c.bf16 %v259, %v257
    %v266 = vpack.c.bf16 %v260, %v258
    %v267 = vpack.c.bf16 %v263, %v261
    %v268 = vpack.c.bf16 %v264, %v262
    %v269 = vpack.c.bf16 %v167, %v165
    %v270 = vpack.c.bf16 %v168, %v166
    %v271 = vpack.c.bf16 %v171, %v169
    %v272 = vpack.c.bf16 %v172, %v170
    %273 = vrot.lane.b32.xlu0 %v165, 127
    %v274 = vpop.permute.xlu0 %273
    %275 = vrot.lane.b32.xlu0 %v166, 127
    %v276 = vpop.permute.xlu0 %275
    %277 = vrot.lane.b32.xlu0 %v167, 127
    %v278 = vpop.permute.xlu0 %277
    %279 = vrot.lane.b32.xlu0 %v168, 127
    %v280 = vpop.permute.xlu0 %279
    %281 = vrot.lane.b32.xlu0 %v169, 127
    %v282 = vpop.permute.xlu0 %281
    %283 = vrot.lane.b32.xlu0 %v170, 127
    %v284 = vpop.permute.xlu0 %283
    %285 = vrot.lane.b32.xlu0 %v171, 127
    %v286 = vpop.permute.xlu0 %285
    %287 = vrot.lane.b32.xlu0 %v172, 127
    %v288 = vpop.permute.xlu0 %287
    %vm289 = vcmask 1039360
    %v290 = vsel %vm289, %v274, %v276
    %v291 = vsel %vm289, %v278, %v280
    %v292 = vsel %vm289, %v282, %v284
    %v293 = vsel %vm289, %v286, %v288
    %v306 = vsel %vm289, %v276, %v274
    %v307 = vsel %vm289, %v280, %v278
    %v308 = vsel %vm289, %v284, %v282
    %v309 = vsel %vm289, %v288, %v286
    %v310 = vadd.s32 %v198, 1
    %v311 = vadd.s32 %v199, 1
    %vm312 = vcmp.ge.s32.totalorder %v310, 0
    %vm313 = vcmp.ge.s32.totalorder %v311, 0
    %vm314 = vcmp.lt.s32.totalorder %v310, 128
    %vm315 = vcmp.lt.s32.totalorder %v311, 128
    %vm316 = vmand %vm312, %vm314
    %vm317 = vmand %vm313, %vm315
    %v318 = vsel %vm316, 1, 0
    %v319 = vsel %vm317, 1, 0
    %vm320 = vcmp.eq.s32.totalorder %v318, 1
    %vm321 = vcmp.eq.s32.totalorder %v319, 1
    %v322 = vsel %vm320, %v290, 0.0
    %v323 = vsel %vm321, %v306, 0.0
    %v324 = vsel %vm320, %v291, 0.0
    %v325 = vsel %vm321, %v307, 0.0
    %v326 = vsel %vm320, %v292, 0.0
    %v327 = vsel %vm321, %v308, 0.0
    %v328 = vsel %vm320, %v293, 0.0
    %v329 = vsel %vm321, %v309, 0.0
    %v330 = vpack.c.bf16 %v324, %v322
    %v331 = vpack.c.bf16 %v325, %v323
    %v332 = vpack.c.bf16 %v328, %v326
    %v333 = vpack.c.bf16 %v329, %v327
    %v334 = vld [vmem:[%s4] sm:$0xf]
    %v335 = vld [vmem:[%s4 + $0x4] sm:$0xf]
    %v336 = vld [vmem:[%s4 + $0x8] sm:$0xf]
    %v337 = vld [vmem:[%s4 + $0xc] sm:$0xf]
    %v338 = vld [vmem:[%s4 + $0x10] sm:$0xf]
    %v339 = vld [vmem:[%s4 + $0x14] sm:$0xf]
    %v340 = vld [vmem:[%s4 + $0x18] sm:$0xf]
    %v341 = vld [vmem:[%s4 + $0x1c] sm:$0xf]
    %v342 = vld [vmem:[%s5] sm:$0xff]
    %v343 = vld [vmem:[%s5 + $0x8] sm:$0xff]
    %v344 = vld [vmem:[%s5 + $0x10] sm:$0xff]
    %v345 = vld [vmem:[%s5 + $0x18] sm:$0xff]
    %v346 = vld [vmem:[%s5 + $0x20] sm:$0xff]
    %v347 = vld [vmem:[%s5 + $0x28] sm:$0xff]
    %v348 = vld [vmem:[%s5 + $0x30] sm:$0xff]
    %v349 = vld [vmem:[%s5 + $0x38] sm:$0xff]
    %351 = vset.pattern.permute.xlu0 0
    %352 = vperm.xlu0 %351, %v342
    %v353 = vpop.permute.xlu0 %352
    %356 = vset.pattern.permute.xlu0 0
    %357 = vperm.xlu0 %356, %v343
    %v358 = vpop.permute.xlu0 %357
    %361 = vset.pattern.permute.xlu0 0
    %362 = vperm.xlu0 %361, %v344
    %v363 = vpop.permute.xlu0 %362
    %366 = vset.pattern.permute.xlu0 0
    %367 = vperm.xlu0 %366, %v345
    %v368 = vpop.permute.xlu0 %367
    %371 = vset.pattern.permute.xlu0 0
    %372 = vperm.xlu0 %371, %v346
    %v373 = vpop.permute.xlu0 %372
    %376 = vset.pattern.permute.xlu0 0
    %377 = vperm.xlu0 %376, %v347
    %v378 = vpop.permute.xlu0 %377
    %381 = vset.pattern.permute.xlu0 0
    %382 = vperm.xlu0 %381, %v348
    %v383 = vpop.permute.xlu0 %382
    %386 = vset.pattern.permute.xlu0 0
    %387 = vperm.xlu0 %386, %v349
    %v388 = vpop.permute.xlu0 %387
    %v398 = vunpack.c.l.b16 %v334
    %v399 = vunpack.c.l.b16 %v335
    %v400 = vunpack.c.l.b16 %v336
    %v401 = vunpack.c.l.b16 %v337
    %v402 = vunpack.c.l.b16 %v338
    %v403 = vunpack.c.l.b16 %v339
    %v404 = vunpack.c.l.b16 %v340
    %v405 = vunpack.c.l.b16 %v341
    %v406 = vpack.c.b16 %v399, %v398
    %v407 = vpack.c.b16 %v401, %v400
    %v408 = vpack.c.b16 %v403, %v402
    %v409 = vpack.c.b16 %v405, %v404
    %vm410 = vcmask 785408
    %v412 = vsel %vm410, %v406, 0
    %v415 = vsel %vm410, %v407, 0
    %v418 = vsel %vm410, %v408, 0
    %v421 = vsel %vm410, %v409, 0
    %423 = vmatprep.subr.bf16.mxu0 %v266
    %424 = vmatpush1.bf16.msra.mxu0 %v265
    %425 = vmatprep.subr.bf16.mxu0 %v268
    %426 = vmatpush1.bf16.msra.mxu0 %v267
    %427 = vmatprep.subr.bf16.mxu0 %v270
    %428 = vmatpush1.bf16.msra.mxu0 %v269
    %429 = vmatprep.subr.bf16.mxu0 %v272
    %430 = vmatpush1.bf16.msra.mxu0 %v271
    %431 = vmatprep.subr.bf16.mxu0 %v331
    %432 = vmatpush1.bf16.msra.mxu0 %v330
    %433 = vmatprep.subr.bf16.mxu0 %v333
    %434 = vmatpush1.bf16.msra.mxu0 %v332
    %435 = vmatprep.subr.bf16.mxu0 0
    %436 = vmatpush1.bf16.msra.mxu0 0
    %437 = vmatprep.subr.bf16.mxu0 0
    %438 = vmatpush1.bf16.msra.mxu0 0
    %439 = vmatprep.subr.bf16.mxu0 0
    %440 = vmatpush1.bf16.msra.mxu0 0
    %441 = vmatprep.subr.bf16.mxu0 0
    %442 = vmatpush1.bf16.msra.mxu0 0
    %443 = vmatprep.subr.bf16.mxu0 0
    %444 = vmatpush1.bf16.msra.mxu0 0
    %445 = vmatprep.subr.bf16.mxu0 0
    %446 = vmatpush1.bf16.msra.mxu0 0
    %447 = vmatprep.subr.bf16.mxu0 0
    %448 = vmatpush1.bf16.msra.mxu0 0
    %449 = vmatprep.subr.bf16.mxu0 0
    %450 = vmatpush1.bf16.msra.mxu0 0
    %451 = vmatprep.subr.bf16.mxu0 0
    %452 = vmatpush1.bf16.msra.mxu0 0
    %453 = vmatprep.subr.bf16.mxu0 0
    %454 = vmatpush1.bf16.msra.mxu0 0
    %455 = vmatprep.mubr.bf16.mxu0 0
    %456 = vmatmul.mubr.bf16.gmra.mrb[0].mxu0 %v412
    %v457 = vpop.f32.mrb[0].mxu0
    %v458 = vadd.f32 %v353, %v457
    %v459 = vpop.f32.mrb[0].mxu0
    %v460 = vadd.f32 %v353, %v459
    %v461 = vpop.f32.mrb[0].mxu0
    %v462 = vadd.f32 %v358, %v461
    %v463 = vpop.f32.mrb[0].mxu0
    %v464 = vadd.f32 %v358, %v463
    %465 = vmatprep.mubr.bf16.mxu0 0
    %466 = vmatmul.mubr.bf16.gmra.mrb[0].mxu0 %v415
    %v467 = vpop.f32.mrb[0].mxu0
    %v468 = vadd.f32 %v363, %v467
    %v469 = vpop.f32.mrb[0].mxu0
    %v470 = vadd.f32 %v363, %v469
    %v471 = vpop.f32.mrb[0].mxu0
    %v472 = vadd.f32 %v368, %v471
    %v473 = vpop.f32.mrb[0].mxu0
    %v474 = vadd.f32 %v368, %v473
    %475 = vmatprep.mubr.bf16.mxu0 0
    %476 = vmatmul.mubr.bf16.gmra.mrb[0].mxu0 %v418
    %v477 = vpop.f32.mrb[0].mxu0
    %v478 = vadd.f32 %v373, %v477
    %v479 = vpop.f32.mrb[0].mxu0
    %v480 = vadd.f32 %v373, %v479
    %v481 = vpop.f32.mrb[0].mxu0
    %v482 = vadd.f32 %v378, %v481
    %v483 = vpop.f32.mrb[0].mxu0
    %v484 = vadd.f32 %v378, %v483
    %485 = vmatprep.mubr.bf16.mxu0 0
    %486 = vmatmul.mubr.bf16.gmra.mrb[0].mxu0 %v421
    %v487 = vpop.f32.mrb[0].mxu0
    %v488 = vadd.f32 %v383, %v487
    %v489 = vpop.f32.mrb[0].mxu0
    %v490 = vadd.f32 %v383, %v489
    %v491 = vpop.f32.mrb[0].mxu0
    %v492 = vadd.f32 %v388, %v491
    %v493 = vpop.f32.mrb[0].mxu0
    %v494 = vadd.f32 %v388, %v493
    %495 = vdwg.mxu0
    %v496 = vtanh.pop %v458
    %v497 = vtanh.pop %v460
    %v498 = vtanh.pop %v462
    %v499 = vtanh.pop %v464
    %v500 = vtanh.pop %v468
    %v501 = vtanh.pop %v470
    %v502 = vtanh.pop %v472
    %v503 = vtanh.pop %v474
    %v504 = vxor.u32 %v478, 2147483648
    %v505 = vxor.u32 %v480, 2147483648
    %v506 = vxor.u32 %v482, 2147483648
    %v507 = vxor.u32 %v484, 2147483648
    %v508 = vxor.u32 %v488, 2147483648
    %v509 = vxor.u32 %v490, 2147483648
    %v510 = vxor.u32 %v492, 2147483648
    %v511 = vxor.u32 %v494, 2147483648
    %v512 = vmul.f32 %v504, 1.442695
    %v513 = vpow.pop %v512
    %v514 = vmul.f32 %v505, 1.442695
    %v515 = vpow.pop %v514
    %v516 = vmul.f32 %v506, 1.442695
    %v517 = vpow.pop %v516
    %v518 = vmul.f32 %v507, 1.442695
    %v519 = vpow.pop %v518
    %v520 = vmul.f32 %v508, 1.442695
    %v521 = vpow.pop %v520
    %v522 = vmul.f32 %v509, 1.442695
    %v523 = vpow.pop %v522
    %v524 = vmul.f32 %v510, 1.442695
    %v525 = vpow.pop %v524
    %v526 = vmul.f32 %v511, 1.442695
    %v527 = vpow.pop %v526
    %v528 = vadd.f32 %v513, 1.0
    %v529 = vadd.f32 %v515, 1.0
    %v530 = vadd.f32 %v517, 1.0
    %v531 = vadd.f32 %v519, 1.0
    %v532 = vadd.f32 %v521, 1.0
    %v533 = vadd.f32 %v523, 1.0
    %v534 = vadd.f32 %v525, 1.0
    %v535 = vadd.f32 %v527, 1.0
    %v536 = vrcp.pop %v528
    %v537 = vmul.f32 1.0, %v536
    %v538 = vrcp.pop %v529
    %v539 = vmul.f32 1.0, %v538
    %v540 = vrcp.pop %v530
    %v541 = vmul.f32 1.0, %v540
    %v542 = vrcp.pop %v531
    %v543 = vmul.f32 1.0, %v542
    %v544 = vrcp.pop %v532
    %v545 = vmul.f32 1.0, %v544
    %v546 = vrcp.pop %v533
    %v547 = vmul.f32 1.0, %v546
    %v548 = vrcp.pop %v534
    %v549 = vmul.f32 1.0, %v548
    %v550 = vrcp.pop %v535
    %v551 = vmul.f32 1.0, %v550
    %v552 = vmul.f32 %v496, %v537
    %v553 = vmul.f32 %v497, %v539
    %v554 = vmul.f32 %v498, %v541
    %v555 = vmul.f32 %v499, %v543
    %v556 = vmul.f32 %v500, %v545
    %v557 = vmul.f32 %v501, %v547
    %v558 = vmul.f32 %v502, %v549
    %v559 = vmul.f32 %v503, %v551
    %v560 = vpack.c.bf16 %v554, %v552
    %v561 = vpack.c.bf16 %v555, %v553
    %v562 = vpack.c.bf16 %v558, %v556
    %v563 = vpack.c.bf16 %v559, %v557
    %v564 = vld [vmem:[%s6] sm:$0xf]
    %v565 = vld [vmem:[%s6 + $0x4] sm:$0xf]
    %v566 = vld [vmem:[%s6 + $0x8] sm:$0xf]
    %v567 = vld [vmem:[%s6 + $0xc] sm:$0xf]
    %v568 = vld [vmem:[%s6 + $0x10] sm:$0xf]
    %v569 = vld [vmem:[%s6 + $0x14] sm:$0xf]
    %v570 = vld [vmem:[%s6 + $0x18] sm:$0xf]
    %v571 = vld [vmem:[%s6 + $0x1c] sm:$0xf]
    %v572 = vld [vmem:[%s7] sm:$0xff]
    %v573 = vld [vmem:[%s7 + $0x8] sm:$0xff]
    %v574 = vld [vmem:[%s7 + $0x10] sm:$0xff]
    %v575 = vld [vmem:[%s7 + $0x18] sm:$0xff]
    %v576 = vld [vmem:[%s7 + $0x20] sm:$0xff]
    %v577 = vld [vmem:[%s7 + $0x28] sm:$0xff]
    %v578 = vld [vmem:[%s7 + $0x30] sm:$0xff]
    %v579 = vld [vmem:[%s7 + $0x38] sm:$0xff]
    %581 = vset.pattern.permute.xlu0 0
    %582 = vperm.xlu0 %581, %v572
    %v583 = vpop.permute.xlu0 %582
    %586 = vset.pattern.permute.xlu0 0
    %587 = vperm.xlu0 %586, %v573
    %v588 = vpop.permute.xlu0 %587
    %591 = vset.pattern.permute.xlu0 0
    %592 = vperm.xlu0 %591, %v574
    %v593 = vpop.permute.xlu0 %592
    %596 = vset.pattern.permute.xlu0 0
    %597 = vperm.xlu0 %596, %v575
    %v598 = vpop.permute.xlu0 %597
    %601 = vset.pattern.permute.xlu0 0
    %602 = vperm.xlu0 %601, %v576
    %v603 = vpop.permute.xlu0 %602
    %606 = vset.pattern.permute.xlu0 0
    %607 = vperm.xlu0 %606, %v577
    %v608 = vpop.permute.xlu0 %607
    %611 = vset.pattern.permute.xlu0 0
    %612 = vperm.xlu0 %611, %v578
    %v613 = vpop.permute.xlu0 %612
    %616 = vset.pattern.permute.xlu0 0
    %617 = vperm.xlu0 %616, %v579
    %v618 = vpop.permute.xlu0 %617
    %v628 = vunpack.c.l.b16 %v564
    %v629 = vunpack.c.l.b16 %v565
    %v630 = vunpack.c.l.b16 %v566
    %v631 = vunpack.c.l.b16 %v567
    %v632 = vunpack.c.l.b16 %v568
    %v633 = vunpack.c.l.b16 %v569
    %v634 = vunpack.c.l.b16 %v570
    %v635 = vunpack.c.l.b16 %v571
    %v636 = vpack.c.b16 %v629, %v628
    %v637 = vpack.c.b16 %v631, %v630
    %v638 = vpack.c.b16 %v633, %v632
    %v639 = vpack.c.b16 %v635, %v634
    %vm640 = vcmask 261120
    %v642 = vsel %vm640, %v636, 0
    %v645 = vsel %vm640, %v637, 0
    %v648 = vsel %vm640, %v638, 0
    %v651 = vsel %vm640, %v639, 0
    %653 = vmatprep.subr.bf16.mxu0 %v561
    %654 = vmatpush1.bf16.msra.mxu0 %v560
    %655 = vmatprep.subr.bf16.mxu0 %v563
    %656 = vmatpush1.bf16.msra.mxu0 %v562
    %657 = vmatprep.subr.bf16.mxu0 0
    %658 = vmatpush1.bf16.msra.mxu0 0
    %659 = vmatprep.subr.bf16.mxu0 0
    %660 = vmatpush1.bf16.msra.mxu0 0
    %661 = vmatprep.subr.bf16.mxu0 0
    %662 = vmatpush1.bf16.msra.mxu0 0
    %663 = vmatprep.subr.bf16.mxu0 0
    %664 = vmatpush1.bf16.msra.mxu0 0
    %665 = vmatprep.subr.bf16.mxu0 0
    %666 = vmatpush1.bf16.msra.mxu0 0
    %667 = vmatprep.subr.bf16.mxu0 0
    %668 = vmatpush1.bf16.msra.mxu0 0
    %669 = vmatprep.subr.bf16.mxu0 0
    %670 = vmatpush1.bf16.msra.mxu0 0
    %671 = vmatprep.subr.bf16.mxu0 0
    %672 = vmatpush1.bf16.msra.mxu0 0
    %673 = vmatprep.subr.bf16.mxu0 0
    %674 = vmatpush1.bf16.msra.mxu0 0
    %675 = vmatprep.subr.bf16.mxu0 0
    %676 = vmatpush1.bf16.msra.mxu0 0
    %677 = vmatprep.subr.bf16.mxu0 0
    %678 = vmatpush1.bf16.msra.mxu0 0
    %679 = vmatprep.subr.bf16.mxu0 0
    %680 = vmatpush1.bf16.msra.mxu0 0
    %681 = vmatprep.subr.bf16.mxu0 0
    %682 = vmatpush1.bf16.msra.mxu0 0
    %683 = vmatprep.subr.bf16.mxu0 0
    %684 = vmatpush1.bf16.msra.mxu0 0
    %685 = vmatprep.mubr.bf16.mxu0 0
    %686 = vmatmul.mubr.bf16.gmra.mrb[0].mxu0 %v642
    %v687 = vpop.f32.mrb[0].mxu0
    %v688 = vadd.f32 %v583, %v687
    %v689 = vpop.f32.mrb[0].mxu0
    %v690 = vadd.f32 %v583, %v689
    %v691 = vpop.f32.mrb[0].mxu0
    %v692 = vadd.f32 %v588, %v691
    %v693 = vpop.f32.mrb[0].mxu0
    %v694 = vadd.f32 %v588, %v693
    %695 = vmatprep.mubr.bf16.mxu0 0
    %696 = vmatmul.mubr.bf16.gmra.mrb[0].mxu0 %v645
    %v697 = vpop.f32.mrb[0].mxu0
    %v698 = vadd.f32 %v593, %v697
    %v699 = vpop.f32.mrb[0].mxu0
    %v700 = vadd.f32 %v593, %v699
    %v701 = vpop.f32.mrb[0].mxu0
    %v702 = vadd.f32 %v598, %v701
    %v703 = vpop.f32.mrb[0].mxu0
    %v704 = vadd.f32 %v598, %v703
    %705 = vmatprep.mubr.bf16.mxu0 0
    %706 = vmatmul.mubr.bf16.gmra.mrb[0].mxu0 %v648
    %v707 = vpop.f32.mrb[0].mxu0
    %v708 = vadd.f32 %v603, %v707
    %v709 = vpop.f32.mrb[0].mxu0
    %v710 = vadd.f32 %v603, %v709
    %v711 = vpop.f32.mrb[0].mxu0
    %v712 = vadd.f32 %v608, %v711
    %v713 = vpop.f32.mrb[0].mxu0
    %v714 = vadd.f32 %v608, %v713
    %715 = vmatprep.mubr.bf16.mxu0 0
    %716 = vmatmul.mubr.bf16.gmra.mrb[0].mxu0 %v651
    %v717 = vpop.f32.mrb[0].mxu0
    %v718 = vadd.f32 %v613, %v717
    %v719 = vpop.f32.mrb[0].mxu0
    %v720 = vadd.f32 %v613, %v719
    %v721 = vpop.f32.mrb[0].mxu0
    %v722 = vadd.f32 %v618, %v721
    %v723 = vpop.f32.mrb[0].mxu0
    %v724 = vadd.f32 %v618, %v723
    %725 = vdwg.mxu0
    %v726 = vadd.f32 %v165, %v688
    %v727 = vadd.f32 %v166, %v690
    %v728 = vadd.f32 %v167, %v692
    %v729 = vadd.f32 %v168, %v694
    %v730 = vadd.f32 %v169, %v698
    %v731 = vadd.f32 %v170, %v700
    %v732 = vadd.f32 %v171, %v702
    %v733 = vadd.f32 %v172, %v704
    %v734 = vmul.f32 %v726, %v160
    %v735 = vmul.f32 %v727, %v164
    %v736 = vmul.f32 %v728, %v160
    %v737 = vmul.f32 %v729, %v164
    %v738 = vmul.f32 %v730, %v160
    %v739 = vmul.f32 %v731, %v164
    %v740 = vmul.f32 %v732, %v160
    %v741 = vmul.f32 %v733, %v164
    %v742 = vadd.f32 %v708, 0.0
    %v743 = vadd.f32 %v710, 0.0
    %v744 = vadd.f32 %v712, 0.0
    %v745 = vadd.f32 %v714, 0.0
    %v746 = vadd.f32 %v718, 0.0
    %v747 = vadd.f32 %v720, 0.0
    %v748 = vadd.f32 %v722, 0.0
    %v749 = vadd.f32 %v724, 0.0
    %754 = vrot.lane.b32.xlu0 %v735, 2
    %v755 = vpop.permute.xlu0 %754
    %756 = vrot.lane.b32.xlu0 %v737, 2
    %v757 = vpop.permute.xlu0 %756
    %758 = vrot.lane.b32.xlu0 %v739, 2
    %v759 = vpop.permute.xlu0 %758
    %760 = vrot.lane.b32.xlu0 %v741, 2
    %v761 = vpop.permute.xlu0 %760
    %770 = vrot.lane.b32.xlu0 %v734, 2
    %v771 = vpop.permute.xlu0 %770
    %772 = vrot.lane.b32.xlu0 %v736, 2
    %v773 = vpop.permute.xlu0 %772
    %774 = vrot.lane.b32.xlu0 %v738, 2
    %v775 = vpop.permute.xlu0 %774
    %776 = vrot.lane.b32.xlu0 %v740, 2
    %v777 = vpop.permute.xlu0 %776
    %vm778 = vcmask 15360
    %v779 = vsel %vm778, %v771, %v755
    %v780 = vsel %vm778, %v773, %v757
    %v781 = vsel %vm778, %v775, %v759
    %v782 = vsel %vm778, %v777, %v761
    %v791 = vsel %vm778, %v755, %v771
    %v792 = vsel %vm778, %v757, %v773
    %v793 = vsel %vm778, %v759, %v775
    %v794 = vsel %vm778, %v761, %v777
    %v795 = vadd.s32 %v198, 4294967294
    %v796 = vadd.s32 %v199, 4294967294
    %vm797 = vcmp.ge.s32.totalorder %v795, 0
    %vm798 = vcmp.ge.s32.totalorder %v796, 0
    %vm799 = vcmp.lt.s32.totalorder %v795, 128
    %vm800 = vcmp.lt.s32.totalorder %v796, 128
    %vm801 = vmand %vm797, %vm799
    %vm802 = vmand %vm798, %vm800
    %v803 = vsel %vm801, 1, 0
    %v804 = vsel %vm802, 1, 0
    %vm805 = vcmp.eq.s32.totalorder %v803, 1
    %vm806 = vcmp.eq.s32.totalorder %v804, 1
    %v807 = vsel %vm805, %v791, 0.0
    %v808 = vsel %vm806, %v779, 0.0
    %v809 = vsel %vm805, %v792, 0.0
    %v810 = vsel %vm806, %v780, 0.0
    %v811 = vsel %vm805, %v793, 0.0
    %v812 = vsel %vm806, %v781, 0.0
    %v813 = vsel %vm805, %v794, 0.0
    %v814 = vsel %vm806, %v782, 0.0
    %v815 = vpack.c.bf16 %v809, %v807
    %v816 = vpack.c.bf16 %v810, %v808
    %v817 = vpack.c.bf16 %v813, %v811
    %v818 = vpack.c.bf16 %v814, %v812
    %v819 = vpack.c.bf16 %v736, %v734
    %v820 = vpack.c.bf16 %v737, %v735
    %v821 = vpack.c.bf16 %v740, %v738
    %v822 = vpack.c.bf16 %v741, %v739
    %823 = vrot.lane.b32.xlu0 %v734, 126
    %v824 = vpop.permute.xlu0 %823
    %825 = vrot.lane.b32.xlu0 %v735, 126
    %v826 = vpop.permute.xlu0 %825
    %827 = vrot.lane.b32.xlu0 %v736, 126
    %v828 = vpop.permute.xlu0 %827
    %829 = vrot.lane.b32.xlu0 %v737, 126
    %v830 = vpop.permute.xlu0 %829
    %831 = vrot.lane.b32.xlu0 %v738, 126
    %v832 = vpop.permute.xlu0 %831
    %833 = vrot.lane.b32.xlu0 %v739, 126
    %v834 = vpop.permute.xlu0 %833
    %835 = vrot.lane.b32.xlu0 %v740, 126
    %v836 = vpop.permute.xlu0 %835
    %837 = vrot.lane.b32.xlu0 %v741, 126
    %v838 = vpop.permute.xlu0 %837
    %vm839 = vcmask 1031168
    %v840 = vsel %vm839, %v824, %v826
    %v841 = vsel %vm839, %v828, %v830
    %v842 = vsel %vm839, %v832, %v834
    %v843 = vsel %vm839, %v836, %v838
    %v856 = vsel %vm839, %v826, %v824
    %v857 = vsel %vm839, %v830, %v828
    %v858 = vsel %vm839, %v834, %v832
    %v859 = vsel %vm839, %v838, %v836
    %v860 = vadd.s32 %v198, 2
    %v861 = vadd.s32 %v199, 2
    %vm862 = vcmp.ge.s32.totalorder %v860, 0
    %vm863 = vcmp.ge.s32.totalorder %v861, 0
    %vm864 = vcmp.lt.s32.totalorder %v860, 128
    %vm865 = vcmp.lt.s32.totalorder %v861, 128
    %vm866 = vmand %vm862, %vm864
    %vm867 = vmand %vm863, %vm865
    %v868 = vsel %vm866, 1, 0
    %v869 = vsel %vm867, 1, 0
    %vm870 = vcmp.eq.s32.totalorder %v868, 1
    %vm871 = vcmp.eq.s32.totalorder %v869, 1
    %v872 = vsel %vm870, %v840, 0.0
    %v873 = vsel %vm871, %v856, 0.0
    %v874 = vsel %vm870, %v841, 0.0
    %v875 = vsel %vm871, %v857, 0.0
    %v876 = vsel %vm870, %v842, 0.0
    %v877 = vsel %vm871, %v858, 0.0
    %v878 = vsel %vm870, %v843, 0.0
    %v879 = vsel %vm871, %v859, 0.0
    %v880 = vpack.c.bf16 %v874, %v872
    %v881 = vpack.c.bf16 %v875, %v873
    %v882 = vpack.c.bf16 %v878, %v876
    %v883 = vpack.c.bf16 %v879, %v877
    %s884 = scalar_lea.vmem %s4, 32
    %v885 = vld [vmem:[%s884] sm:$0xf]
    %v886 = vld [vmem:[%s884 + $0x4] sm:$0xf]
    %v887 = vld [vmem:[%s884 + $0x8] sm:$0xf]
    %v888 = vld [vmem:[%s884 + $0xc] sm:$0xf]
    %v889 = vld [vmem:[%s884 + $0x10] sm:$0xf]
    %v890 = vld [vmem:[%s884 + $0x14] sm:$0xf]
    %v891 = vld [vmem:[%s884 + $0x18] sm:$0xf]
    %v892 = vld [vmem:[%s884 + $0x1c] sm:$0xf]
    %s893 = scalar_lea.vmem %s5, 64
    %v894 = vld [vmem:[%s893] sm:$0xff]
    %v895 = vld [vmem:[%s893 + $0x8] sm:$0xff]
    %v896 = vld [vmem:[%s893 + $0x10] sm:$0xff]
    %v897 = vld [vmem:[%s893 + $0x18] sm:$0xff]
    %v898 = vld [vmem:[%s893 + $0x20] sm:$0xff]
    %v899 = vld [vmem:[%s893 + $0x28] sm:$0xff]
    %v900 = vld [vmem:[%s893 + $0x30] sm:$0xff]
    %v901 = vld [vmem:[%s893 + $0x38] sm:$0xff]
    %903 = vset.pattern.permute.xlu0 0
    %904 = vperm.xlu0 %903, %v894
    %v905 = vpop.permute.xlu0 %904
    %908 = vset.pattern.permute.xlu0 0
    %909 = vperm.xlu0 %908, %v895
    %v910 = vpop.permute.xlu0 %909
    %913 = vset.pattern.permute.xlu0 0
    %914 = vperm.xlu0 %913, %v896
    %v915 = vpop.permute.xlu0 %914
    %918 = vset.pattern.permute.xlu0 0
    %919 = vperm.xlu0 %918, %v897
    %v920 = vpop.permute.xlu0 %919
    %923 = vset.pattern.permute.xlu0 0
    %924 = vperm.xlu0 %923, %v898
    %v925 = vpop.permute.xlu0 %924
    %928 = vset.pattern.permute.xlu0 0
    %929 = vperm.xlu0 %928, %v899
    %v930 = vpop.permute.xlu0 %929
    %933 = vset.pattern.permute.xlu0 0
    %934 = vperm.xlu0 %933, %v900
    %v935 = vpop.permute.xlu0 %934
    %938 = vset.pattern.permute.xlu0 0
    %939 = vperm.xlu0 %938, %v901
    %v940 = vpop.permute.xlu0 %939
    %v950 = vunpack.c.l.b16 %v885
    %v951 = vunpack.c.l.b16 %v886
    %v952 = vunpack.c.l.b16 %v887
    %v953 = vunpack.c.l.b16 %v888
    %v954 = vunpack.c.l.b16 %v889
    %v955 = vunpack.c.l.b16 %v890
    %v956 = vunpack.c.l.b16 %v891
    %v957 = vunpack.c.l.b16 %v892
    %v958 = vpack.c.b16 %v951, %v950
    %v959 = vpack.c.b16 %v953, %v952
    %v960 = vpack.c.b16 %v955, %v954
    %v961 = vpack.c.b16 %v957, %v956
    %v963 = vsel %vm410, %v958, 0
    %v966 = vsel %vm410, %v959, 0
    %v969 = vsel %vm410, %v960, 0
    %v972 = vsel %vm410, %v961, 0
    %974 = vmatprep.subr.bf16.mxu0 %v816
    %975 = vmatpush1.bf16.msra.mxu0 %v815
    %976 = vmatprep.subr.bf16.mxu0 %v818
    %977 = vmatpush1.bf16.msra.mxu0 %v817
    %978 = vmatprep.subr.bf16.mxu0 %v820
    %979 = vmatpush1.bf16.msra.mxu0 %v819
    %980 = vmatprep.subr.bf16.mxu0 %v822
    %981 = vmatpush1.bf16.msra.mxu0 %v821
    %982 = vmatprep.subr.bf16.mxu0 %v881
    %983 = vmatpush1.bf16.msra.mxu0 %v880
    %984 = vmatprep.subr.bf16.mxu0 %v883
    %985 = vmatpush1.bf16.msra.mxu0 %v882
    %986 = vmatprep.subr.bf16.mxu0 0
    %987 = vmatpush1.bf16.msra.mxu0 0
    %988 = vmatprep.subr.bf16.mxu0 0
    %989 = vmatpush1.bf16.msra.mxu0 0
    %990 = vmatprep.subr.bf16.mxu0 0
    %991 = vmatpush1.bf16.msra.mxu0 0
    %992 = vmatprep.subr.bf16.mxu0 0
    %993 = vmatpush1.bf16.msra.mxu0 0
    %994 = vmatprep.subr.bf16.mxu0 0
    %995 = vmatpush1.bf16.msra.mxu0 0
    %996 = vmatprep.subr.bf16.mxu0 0
    %997 = vmatpush1.bf16.msra.mxu0 0
    %998 = vmatprep.subr.bf16.mxu0 0
    %999 = vmatpush1.bf16.msra.mxu0 0
    %1000 = vmatprep.subr.bf16.mxu0 0
    %1001 = vmatpush1.bf16.msra.mxu0 0
    %1002 = vmatprep.subr.bf16.mxu0 0
    %1003 = vmatpush1.bf16.msra.mxu0 0
    %1004 = vmatprep.subr.bf16.mxu0 0
    %1005 = vmatpush1.bf16.msra.mxu0 0
    %1006 = vmatprep.mubr.bf16.mxu0 0
    %1007 = vmatmul.mubr.bf16.gmra.mrb[0].mxu0 %v963
    %v1008 = vpop.f32.mrb[0].mxu0
    %v1009 = vadd.f32 %v905, %v1008
    %v1010 = vpop.f32.mrb[0].mxu0
    %v1011 = vadd.f32 %v905, %v1010
    %v1012 = vpop.f32.mrb[0].mxu0
    %v1013 = vadd.f32 %v910, %v1012
    %v1014 = vpop.f32.mrb[0].mxu0
    %v1015 = vadd.f32 %v910, %v1014
    %1016 = vmatprep.mubr.bf16.mxu0 0
    %1017 = vmatmul.mubr.bf16.gmra.mrb[0].mxu0 %v966
    %v1018 = vpop.f32.mrb[0].mxu0
    %v1019 = vadd.f32 %v915, %v1018
    %v1020 = vpop.f32.mrb[0].mxu0
    %v1021 = vadd.f32 %v915, %v1020
    %v1022 = vpop.f32.mrb[0].mxu0
    %v1023 = vadd.f32 %v920, %v1022
    %v1024 = vpop.f32.mrb[0].mxu0
    %v1025 = vadd.f32 %v920, %v1024
    %1026 = vmatprep.mubr.bf16.mxu0 0
    %1027 = vmatmul.mubr.bf16.gmra.mrb[0].mxu0 %v969
    %v1028 = vpop.f32.mrb[0].mxu0
    %v1029 = vadd.f32 %v925, %v1028
    %v1030 = vpop.f32.mrb[0].mxu0
    %v1031 = vadd.f32 %v925, %v1030
    %v1032 = vpop.f32.mrb[0].mxu0
    %v1033 = vadd.f32 %v930, %v1032
    %v1034 = vpop.f32.mrb[0].mxu0
    %v1035 = vadd.f32 %v930, %v1034
    %1036 = vmatprep.mubr.bf16.mxu0 0
    %1037 = vmatmul.mubr.bf16.gmra.mrb[0].mxu0 %v972
    %v1038 = vpop.f32.mrb[0].mxu0
    %v1039 = vadd.f32 %v935, %v1038
    %v1040 = vpop.f32.mrb[0].mxu0
    %v1041 = vadd.f32 %v935, %v1040
    %v1042 = vpop.f32.mrb[0].mxu0
    %v1043 = vadd.f32 %v940, %v1042
    %v1044 = vpop.f32.mrb[0].mxu0
    %v1045 = vadd.f32 %v940, %v1044
    %1046 = vdwg.mxu0
    %v1047 = vtanh.pop %v1009
    %v1048 = vtanh.pop %v1011
    %v1049 = vtanh.pop %v1013
    %v1050 = vtanh.pop %v1015
    %v1051 = vtanh.pop %v1019
    %v1052 = vtanh.pop %v1021
    %v1053 = vtanh.pop %v1023
    %v1054 = vtanh.pop %v1025
    %v1055 = vxor.u32 %v1029, 2147483648
    %v1056 = vxor.u32 %v1031, 2147483648
    %v1057 = vxor.u32 %v1033, 2147483648
    %v1058 = vxor.u32 %v1035, 2147483648
    %v1059 = vxor.u32 %v1039, 2147483648
    %v1060 = vxor.u32 %v1041, 2147483648
    %v1061 = vxor.u32 %v1043, 2147483648
    %v1062 = vxor.u32 %v1045, 2147483648
    %v1063 = vmul.f32 %v1055, 1.442695
    %v1064 = vpow.pop %v1063
    %v1065 = vmul.f32 %v1056, 1.442695
    %v1066 = vpow.pop %v1065
    %v1067 = vmul.f32 %v1057, 1.442695
    %v1068 = vpow.pop %v1067
    %v1069 = vmul.f32 %v1058, 1.442695
    %v1070 = vpow.pop %v1069
    %v1071 = vmul.f32 %v1059, 1.442695
    %v1072 = vpow.pop %v1071
    %v1073 = vmul.f32 %v1060, 1.442695
    %v1074 = vpow.pop %v1073
    %v1075 = vmul.f32 %v1061, 1.442695
    %v1076 = vpow.pop %v1075
    %v1077 = vmul.f32 %v1062, 1.442695
    %v1078 = vpow.pop %v1077
    %v1079 = vadd.f32 %v1064, 1.0
    %v1080 = vadd.f32 %v1066, 1.0
    %v1081 = vadd.f32 %v1068, 1.0
    %v1082 = vadd.f32 %v1070, 1.0
    %v1083 = vadd.f32 %v1072, 1.0
    %v1084 = vadd.f32 %v1074, 1.0
    %v1085 = vadd.f32 %v1076, 1.0
    %v1086 = vadd.f32 %v1078, 1.0
    %v1087 = vrcp.pop %v1079
    %v1088 = vmul.f32 1.0, %v1087
    %v1089 = vrcp.pop %v1080
    %v1090 = vmul.f32 1.0, %v1089
    %v1091 = vrcp.pop %v1081
    %v1092 = vmul.f32 1.0, %v1091
    %v1093 = vrcp.pop %v1082
    %v1094 = vmul.f32 1.0, %v1093
    %v1095 = vrcp.pop %v1083
    %v1096 = vmul.f32 1.0, %v1095
    %v1097 = vrcp.pop %v1084
    %v1098 = vmul.f32 1.0, %v1097
    %v1099 = vrcp.pop %v1085
    %v1100 = vmul.f32 1.0, %v1099
    %v1101 = vrcp.pop %v1086
    %v1102 = vmul.f32 1.0, %v1101
    %v1103 = vmul.f32 %v1047, %v1088
    %v1104 = vmul.f32 %v1048, %v1090
    %v1105 = vmul.f32 %v1049, %v1092
    %v1106 = vmul.f32 %v1050, %v1094
    %v1107 = vmul.f32 %v1051, %v1096
    %v1108 = vmul.f32 %v1052, %v1098
    %v1109 = vmul.f32 %v1053, %v1100
    %v1110 = vmul.f32 %v1054, %v1102
    %v1111 = vpack.c.bf16 %v1105, %v1103
    %v1112 = vpack.c.bf16 %v1106, %v1104
    %v1113 = vpack.c.bf16 %v1109, %v1107
    %v1114 = vpack.c.bf16 %v1110, %v1108
    %s1115 = scalar_lea.vmem %s6, 32
    %v1116 = vld [vmem:[%s1115] sm:$0xf]
    %v1117 = vld [vmem:[%s1115 + $0x4] sm:$0xf]
    %v1118 = vld [vmem:[%s1115 + $0x8] sm:$0xf]
    %v1119 = vld [vmem:[%s1115 + $0xc] sm:$0xf]
    %v1120 = vld [vmem:[%s1115 + $0x10] sm:$0xf]
    %v1121 = vld [vmem:[%s1115 + $0x14] sm:$0xf]
    %v1122 = vld [vmem:[%s1115 + $0x18] sm:$0xf]
    %v1123 = vld [vmem:[%s1115 + $0x1c] sm:$0xf]
    %s1124 = scalar_lea.vmem %s7, 64
    %v1125 = vld [vmem:[%s1124] sm:$0xff]
    %v1126 = vld [vmem:[%s1124 + $0x8] sm:$0xff]
    %v1127 = vld [vmem:[%s1124 + $0x10] sm:$0xff]
    %v1128 = vld [vmem:[%s1124 + $0x18] sm:$0xff]
    %v1129 = vld [vmem:[%s1124 + $0x20] sm:$0xff]
    %v1130 = vld [vmem:[%s1124 + $0x28] sm:$0xff]
    %v1131 = vld [vmem:[%s1124 + $0x30] sm:$0xff]
    %v1132 = vld [vmem:[%s1124 + $0x38] sm:$0xff]
    %1134 = vset.pattern.permute.xlu0 0
    %1135 = vperm.xlu0 %1134, %v1125
    %v1136 = vpop.permute.xlu0 %1135
    %1139 = vset.pattern.permute.xlu0 0
    %1140 = vperm.xlu0 %1139, %v1126
    %v1141 = vpop.permute.xlu0 %1140
    %1144 = vset.pattern.permute.xlu0 0
    %1145 = vperm.xlu0 %1144, %v1127
    %v1146 = vpop.permute.xlu0 %1145
    %1149 = vset.pattern.permute.xlu0 0
    %1150 = vperm.xlu0 %1149, %v1128
    %v1151 = vpop.permute.xlu0 %1150
    %1154 = vset.pattern.permute.xlu0 0
    %1155 = vperm.xlu0 %1154, %v1129
    %v1156 = vpop.permute.xlu0 %1155
    %1159 = vset.pattern.permute.xlu0 0
    %1160 = vperm.xlu0 %1159, %v1130
    %v1161 = vpop.permute.xlu0 %1160
    %1164 = vset.pattern.permute.xlu0 0
    %1165 = vperm.xlu0 %1164, %v1131
    %v1166 = vpop.permute.xlu0 %1165
    %1169 = vset.pattern.permute.xlu0 0
    %1170 = vperm.xlu0 %1169, %v1132
    %v1171 = vpop.permute.xlu0 %1170
    %v1181 = vunpack.c.l.b16 %v1116
    %v1182 = vunpack.c.l.b16 %v1117
    %v1183 = vunpack.c.l.b16 %v1118
    %v1184 = vunpack.c.l.b16 %v1119
    %v1185 = vunpack.c.l.b16 %v1120
    %v1186 = vunpack.c.l.b16 %v1121
    %v1187 = vunpack.c.l.b16 %v1122
    %v1188 = vunpack.c.l.b16 %v1123
    %v1189 = vpack.c.b16 %v1182, %v1181
    %v1190 = vpack.c.b16 %v1184, %v1183
    %v1191 = vpack.c.b16 %v1186, %v1185
    %v1192 = vpack.c.b16 %v1188, %v1187
    %v1194 = vsel %vm640, %v1189, 0
    %v1197 = vsel %vm640, %v1190, 0
    %v1200 = vsel %vm640, %v1191, 0
    %v1203 = vsel %vm640, %v1192, 0
    %1205 = vmatprep.subr.bf16.mxu0 %v1112
    %1206 = vmatpush1.bf16.msra.mxu0 %v1111
    %1207 = vmatprep.subr.bf16.mxu0 %v1114
    %1208 = vmatpush1.bf16.msra.mxu0 %v1113
    %1209 = vmatprep.subr.bf16.mxu0 0
    %1210 = vmatpush1.bf16.msra.mxu0 0
    %1211 = vmatprep.subr.bf16.mxu0 0
    %1212 = vmatpush1.bf16.msra.mxu0 0
    %1213 = vmatprep.subr.bf16.mxu0 0
    %1214 = vmatpush1.bf16.msra.mxu0 0
    %1215 = vmatprep.subr.bf16.mxu0 0
    %1216 = vmatpush1.bf16.msra.mxu0 0
    %1217 = vmatprep.subr.bf16.mxu0 0
    %1218 = vmatpush1.bf16.msra.mxu0 0
    %1219 = vmatprep.subr.bf16.mxu0 0
    %1220 = vmatpush1.bf16.msra.mxu0 0
    %1221 = vmatprep.subr.bf16.mxu0 0
    %1222 = vmatpush1.bf16.msra.mxu0 0
    %1223 = vmatprep.subr.bf16.mxu0 0
    %1224 = vmatpush1.bf16.msra.mxu0 0
    %1225 = vmatprep.subr.bf16.mxu0 0
    %1226 = vmatpush1.bf16.msra.mxu0 0
    %1227 = vmatprep.subr.bf16.mxu0 0
    %1228 = vmatpush1.bf16.msra.mxu0 0
    %1229 = vmatprep.subr.bf16.mxu0 0
    %1230 = vmatpush1.bf16.msra.mxu0 0
    %1231 = vmatprep.subr.bf16.mxu0 0
    %1232 = vmatpush1.bf16.msra.mxu0 0
    %1233 = vmatprep.subr.bf16.mxu0 0
    %1234 = vmatpush1.bf16.msra.mxu0 0
    %1235 = vmatprep.subr.bf16.mxu0 0
    %1236 = vmatpush1.bf16.msra.mxu0 0
    %1237 = vmatprep.mubr.bf16.mxu0 0
    %1238 = vmatmul.mubr.bf16.gmra.mrb[0].mxu0 %v1194
    %v1239 = vpop.f32.mrb[0].mxu0
    %v1240 = vadd.f32 %v1136, %v1239
    %v1241 = vpop.f32.mrb[0].mxu0
    %v1242 = vadd.f32 %v1136, %v1241
    %v1243 = vpop.f32.mrb[0].mxu0
    %v1244 = vadd.f32 %v1141, %v1243
    %v1245 = vpop.f32.mrb[0].mxu0
    %v1246 = vadd.f32 %v1141, %v1245
    %1247 = vmatprep.mubr.bf16.mxu0 0
    %1248 = vmatmul.mubr.bf16.gmra.mrb[0].mxu0 %v1197
    %v1249 = vpop.f32.mrb[0].mxu0
    %v1250 = vadd.f32 %v1146, %v1249
    %v1251 = vpop.f32.mrb[0].mxu0
    %v1252 = vadd.f32 %v1146, %v1251
    %v1253 = vpop.f32.mrb[0].mxu0
    %v1254 = vadd.f32 %v1151, %v1253
    %v1255 = vpop.f32.mrb[0].mxu0
    %v1256 = vadd.f32 %v1151, %v1255
    %1257 = vmatprep.mubr.bf16.mxu0 0
    %1258 = vmatmul.mubr.bf16.gmra.mrb[0].mxu0 %v1200
    %v1259 = vpop.f32.mrb[0].mxu0
    %v1260 = vadd.f32 %v1156, %v1259
    %v1261 = vpop.f32.mrb[0].mxu0
    %v1262 = vadd.f32 %v1156, %v1261
    %v1263 = vpop.f32.mrb[0].mxu0
    %v1264 = vadd.f32 %v1161, %v1263
    %v1265 = vpop.f32.mrb[0].mxu0
    %v1266 = vadd.f32 %v1161, %v1265
    %1267 = vmatprep.mubr.bf16.mxu0 0
    %1268 = vmatmul.mubr.bf16.gmra.mrb[0].mxu0 %v1203
    %v1269 = vpop.f32.mrb[0].mxu0
    %v1270 = vadd.f32 %v1166, %v1269
    %v1271 = vpop.f32.mrb[0].mxu0
    %v1272 = vadd.f32 %v1166, %v1271
    %v1273 = vpop.f32.mrb[0].mxu0
    %v1274 = vadd.f32 %v1171, %v1273
    %v1275 = vpop.f32.mrb[0].mxu0
    %v1276 = vadd.f32 %v1171, %v1275
    %1277 = vdwg.mxu0
    %v1278 = vadd.f32 %v734, %v1240
    %v1279 = vadd.f32 %v735, %v1242
    %v1280 = vadd.f32 %v736, %v1244
    %v1281 = vadd.f32 %v737, %v1246
    %v1282 = vadd.f32 %v738, %v1250
    %v1283 = vadd.f32 %v739, %v1252
    %v1284 = vadd.f32 %v740, %v1254
    %v1285 = vadd.f32 %v741, %v1256
    %v1286 = vmul.f32 %v1278, %v160
    %v1287 = vmul.f32 %v1279, %v164
    %v1288 = vmul.f32 %v1280, %v160
    %v1289 = vmul.f32 %v1281, %v164
    %v1290 = vmul.f32 %v1282, %v160
    %v1291 = vmul.f32 %v1283, %v164
    %v1292 = vmul.f32 %v1284, %v160
    %v1293 = vmul.f32 %v1285, %v164
    %v1294 = vadd.f32 %v742, %v1260
    %v1295 = vadd.f32 %v743, %v1262
    %v1296 = vadd.f32 %v744, %v1264
    %v1297 = vadd.f32 %v745, %v1266
    %v1298 = vadd.f32 %v746, %v1270
    %v1299 = vadd.f32 %v747, %v1272
    %v1300 = vadd.f32 %v748, %v1274
    %v1301 = vadd.f32 %v749, %v1276
    %1306 = vrot.lane.b32.xlu0 %v1287, 4
    %v1307 = vpop.permute.xlu0 %1306
    %1308 = vrot.lane.b32.xlu0 %v1289, 4
    %v1309 = vpop.permute.xlu0 %1308
    %1310 = vrot.lane.b32.xlu0 %v1291, 4
    %v1311 = vpop.permute.xlu0 %1310
    %1312 = vrot.lane.b32.xlu0 %v1293, 4
    %v1313 = vpop.permute.xlu0 %1312
    %1322 = vrot.lane.b32.xlu0 %v1286, 4
    %v1323 = vpop.permute.xlu0 %1322
    %1324 = vrot.lane.b32.xlu0 %v1288, 4
    %v1325 = vpop.permute.xlu0 %1324
    %1326 = vrot.lane.b32.xlu0 %v1290, 4
    %v1327 = vpop.permute.xlu0 %1326
    %1328 = vrot.lane.b32.xlu0 %v1292, 4
    %v1329 = vpop.permute.xlu0 %1328
    %vm1330 = vcmask 31744
    %v1331 = vsel %vm1330, %v1323, %v1307
    %v1332 = vsel %vm1330, %v1325, %v1309
    %v1333 = vsel %vm1330, %v1327, %v1311
    %v1334 = vsel %vm1330, %v1329, %v1313
    %v1343 = vsel %vm1330, %v1307, %v1323
    %v1344 = vsel %vm1330, %v1309, %v1325
    %v1345 = vsel %vm1330, %v1311, %v1327
    %v1346 = vsel %vm1330, %v1313, %v1329
    %v1347 = vadd.s32 %v198, 4294967292
    %v1348 = vadd.s32 %v199, 4294967292
    %vm1349 = vcmp.ge.s32.totalorder %v1347, 0
    %vm1350 = vcmp.ge.s32.totalorder %v1348, 0
    %vm1351 = vcmp.lt.s32.totalorder %v1347, 128
    %vm1352 = vcmp.lt.s32.totalorder %v1348, 128
    %vm1353 = vmand %vm1349, %vm1351
    %vm1354 = vmand %vm1350, %vm1352
    %v1355 = vsel %vm1353, 1, 0
    %v1356 = vsel %vm1354, 1, 0
    %vm1357 = vcmp.eq.s32.totalorder %v1355, 1
    %vm1358 = vcmp.eq.s32.totalorder %v1356, 1
    %v1359 = vsel %vm1357, %v1343, 0.0
    %v1360 = vsel %vm1358, %v1331, 0.0
    %v1361 = vsel %vm1357, %v1344, 0.0
    %v1362 = vsel %vm1358, %v1332, 0.0
    %v1363 = vsel %vm1357, %v1345, 0.0
    %v1364 = vsel %vm1358, %v1333, 0.0
    %v1365 = vsel %vm1357, %v1346, 0.0
    %v1366 = vsel %vm1358, %v1334, 0.0
    %v1367 = vpack.c.bf16 %v1361, %v1359
    %v1368 = vpack.c.bf16 %v1362, %v1360
    %v1369 = vpack.c.bf16 %v1365, %v1363
    %v1370 = vpack.c.bf16 %v1366, %v1364
    %v1371 = vpack.c.bf16 %v1288, %v1286
    %v1372 = vpack.c.bf16 %v1289, %v1287
    %v1373 = vpack.c.bf16 %v1292, %v1290
    %v1374 = vpack.c.bf16 %v1293, %v1291
    %1375 = vrot.lane.b32.xlu0 %v1286, 124
    %v1376 = vpop.permute.xlu0 %1375
    %1377 = vrot.lane.b32.xlu0 %v1287, 124
    %v1378 = vpop.permute.xlu0 %1377
    %1379 = vrot.lane.b32.xlu0 %v1288, 124
    %v1380 = vpop.permute.xlu0 %1379
    %1381 = vrot.lane.b32.xlu0 %v1289, 124
    %v1382 = vpop.permute.xlu0 %1381
    %1383 = vrot.lane.b32.xlu0 %v1290, 124
    %v1384 = vpop.permute.xlu0 %1383
    %1385 = vrot.lane.b32.xlu0 %v1291, 124
    %v1386 = vpop.permute.xlu0 %1385
    %1387 = vrot.lane.b32.xlu0 %v1292, 124
    %v1388 = vpop.permute.xlu0 %1387
    %1389 = vrot.lane.b32.xlu0 %v1293, 124
    %v1390 = vpop.permute.xlu0 %1389
    %vm1391 = vcmask 1014784
    %v1392 = vsel %vm1391, %v1376, %v1378
    %v1393 = vsel %vm1391, %v1380, %v1382
    %v1394 = vsel %vm1391, %v1384, %v1386
    %v1395 = vsel %vm1391, %v1388, %v1390
    %v1408 = vsel %vm1391, %v1378, %v1376
    %v1409 = vsel %vm1391, %v1382, %v1380
    %v1410 = vsel %vm1391, %v1386, %v1384
    %v1411 = vsel %vm1391, %v1390, %v1388
    %v1412 = vadd.s32 %v198, 4
    %v1413 = vadd.s32 %v199, 4
    %vm1414 = vcmp.ge.s32.totalorder %v1412, 0
    %vm1415 = vcmp.ge.s32.totalorder %v1413, 0
    %vm1416 = vcmp.lt.s32.totalorder %v1412, 128
    %vm1417 = vcmp.lt.s32.totalorder %v1413, 128
    %vm1418 = vmand %vm1414, %vm1416
    %vm1419 = vmand %vm1415, %vm1417
    %v1420 = vsel %vm1418, 1, 0
    %v1421 = vsel %vm1419, 1, 0
    %vm1422 = vcmp.eq.s32.totalorder %v1420, 1
    %vm1423 = vcmp.eq.s32.totalorder %v1421, 1
    %v1424 = vsel %vm1422, %v1392, 0.0
    %v1425 = vsel %vm1423, %v1408, 0.0
    %v1426 = vsel %vm1422, %v1393, 0.0
    %v1427 = vsel %vm1423, %v1409, 0.0
    %v1428 = vsel %vm1422, %v1394, 0.0
    %v1429 = vsel %vm1423, %v1410, 0.0
    %v1430 = vsel %vm1422, %v1395, 0.0
    %v1431 = vsel %vm1423, %v1411, 0.0
    %v1432 = vpack.c.bf16 %v1426, %v1424
    %v1433 = vpack.c.bf16 %v1427, %v1425
    %v1434 = vpack.c.bf16 %v1430, %v1428
    %v1435 = vpack.c.bf16 %v1431, %v1429
    %s1436 = scalar_lea.vmem %s4, 64
    %v1437 = vld [vmem:[%s1436] sm:$0xf]
    %v1438 = vld [vmem:[%s1436 + $0x4] sm:$0xf]
    %v1439 = vld [vmem:[%s1436 + $0x8] sm:$0xf]
    %v1440 = vld [vmem:[%s1436 + $0xc] sm:$0xf]
    %v1441 = vld [vmem:[%s1436 + $0x10] sm:$0xf]
    %v1442 = vld [vmem:[%s1436 + $0x14] sm:$0xf]
    %v1443 = vld [vmem:[%s1436 + $0x18] sm:$0xf]
    %v1444 = vld [vmem:[%s1436 + $0x1c] sm:$0xf]
    %s1445 = scalar_lea.vmem %s5, 128
    %v1446 = vld [vmem:[%s1445] sm:$0xff]
    %v1447 = vld [vmem:[%s1445 + $0x8] sm:$0xff]
    %v1448 = vld [vmem:[%s1445 + $0x10] sm:$0xff]
    %v1449 = vld [vmem:[%s1445 + $0x18] sm:$0xff]
    %v1450 = vld [vmem:[%s1445 + $0x20] sm:$0xff]
    %v1451 = vld [vmem:[%s1445 + $0x28] sm:$0xff]
    %v1452 = vld [vmem:[%s1445 + $0x30] sm:$0xff]
    %v1453 = vld [vmem:[%s1445 + $0x38] sm:$0xff]
    %1455 = vset.pattern.permute.xlu0 0
    %1456 = vperm.xlu0 %1455, %v1446
    %v1457 = vpop.permute.xlu0 %1456
    %1460 = vset.pattern.permute.xlu0 0
    %1461 = vperm.xlu0 %1460, %v1447
    %v1462 = vpop.permute.xlu0 %1461
    %1465 = vset.pattern.permute.xlu0 0
    %1466 = vperm.xlu0 %1465, %v1448
    %v1467 = vpop.permute.xlu0 %1466
    %1470 = vset.pattern.permute.xlu0 0
    %1471 = vperm.xlu0 %1470, %v1449
    %v1472 = vpop.permute.xlu0 %1471
    %1475 = vset.pattern.permute.xlu0 0
    %1476 = vperm.xlu0 %1475, %v1450
    %v1477 = vpop.permute.xlu0 %1476
    %1480 = vset.pattern.permute.xlu0 0
    %1481 = vperm.xlu0 %1480, %v1451
    %v1482 = vpop.permute.xlu0 %1481
    %1485 = vset.pattern.permute.xlu0 0
    %1486 = vperm.xlu0 %1485, %v1452
    %v1487 = vpop.permute.xlu0 %1486
    %1490 = vset.pattern.permute.xlu0 0
    %1491 = vperm.xlu0 %1490, %v1453
    %v1492 = vpop.permute.xlu0 %1491
    %v1502 = vunpack.c.l.b16 %v1437
    %v1503 = vunpack.c.l.b16 %v1438
    %v1504 = vunpack.c.l.b16 %v1439
    %v1505 = vunpack.c.l.b16 %v1440
    %v1506 = vunpack.c.l.b16 %v1441
    %v1507 = vunpack.c.l.b16 %v1442
    %v1508 = vunpack.c.l.b16 %v1443
    %v1509 = vunpack.c.l.b16 %v1444
    %v1510 = vpack.c.b16 %v1503, %v1502
    %v1511 = vpack.c.b16 %v1505, %v1504
    %v1512 = vpack.c.b16 %v1507, %v1506
    %v1513 = vpack.c.b16 %v1509, %v1508
    %v1515 = vsel %vm410, %v1510, 0
    %v1518 = vsel %vm410, %v1511, 0
    %v1521 = vsel %vm410, %v1512, 0
    %v1524 = vsel %vm410, %v1513, 0
    %1526 = vmatprep.subr.bf16.mxu0 %v1368
    %1527 = vmatpush1.bf16.msra.mxu0 %v1367
    %1528 = vmatprep.subr.bf16.mxu0 %v1370
    %1529 = vmatpush1.bf16.msra.mxu0 %v1369
    %1530 = vmatprep.subr.bf16.mxu0 %v1372
    %1531 = vmatpush1.bf16.msra.mxu0 %v1371
    %1532 = vmatprep.subr.bf16.mxu0 %v1374
    %1533 = vmatpush1.bf16.msra.mxu0 %v1373
    %1534 = vmatprep.subr.bf16.mxu0 %v1433
    %1535 = vmatpush1.bf16.msra.mxu0 %v1432
    %1536 = vmatprep.subr.bf16.mxu0 %v1435
    %1537 = vmatpush1.bf16.msra.mxu0 %v1434
    %1538 = vmatprep.subr.bf16.mxu0 0
    %1539 = vmatpush1.bf16.msra.mxu0 0
    %1540 = vmatprep.subr.bf16.mxu0 0
    %1541 = vmatpush1.bf16.msra.mxu0 0
    %1542 = vmatprep.subr.bf16.mxu0 0
    %1543 = vmatpush1.bf16.msra.mxu0 0
    %1544 = vmatprep.subr.bf16.mxu0 0
    %1545 = vmatpush1.bf16.msra.mxu0 0
    %1546 = vmatprep.subr.bf16.mxu0 0
    %1547 = vmatpush1.bf16.msra.mxu0 0
    %1548 = vmatprep.subr.bf16.mxu0 0
    %1549 = vmatpush1.bf16.msra.mxu0 0
    %1550 = vmatprep.subr.bf16.mxu0 0
    %1551 = vmatpush1.bf16.msra.mxu0 0
    %1552 = vmatprep.subr.bf16.mxu0 0
    %1553 = vmatpush1.bf16.msra.mxu0 0
    %1554 = vmatprep.subr.bf16.mxu0 0
    %1555 = vmatpush1.bf16.msra.mxu0 0
    %1556 = vmatprep.subr.bf16.mxu0 0
    %1557 = vmatpush1.bf16.msra.mxu0 0
    %1558 = vmatprep.mubr.bf16.mxu0 0
    %1559 = vmatmul.mubr.bf16.gmra.mrb[0].mxu0 %v1515
    %v1560 = vpop.f32.mrb[0].mxu0
    %v1561 = vadd.f32 %v1457, %v1560
    %v1562 = vpop.f32.mrb[0].mxu0
    %v1563 = vadd.f32 %v1457, %v1562
    %v1564 = vpop.f32.mrb[0].mxu0
    %v1565 = vadd.f32 %v1462, %v1564
    %v1566 = vpop.f32.mrb[0].mxu0
    %v1567 = vadd.f32 %v1462, %v1566
    %1568 = vmatprep.mubr.bf16.mxu0 0
    %1569 = vmatmul.mubr.bf16.gmra.mrb[0].mxu0 %v1518
    %v1570 = vpop.f32.mrb[0].mxu0
    %v1571 = vadd.f32 %v1467, %v1570
    %v1572 = vpop.f32.mrb[0].mxu0
    %v1573 = vadd.f32 %v1467, %v1572
    %v1574 = vpop.f32.mrb[0].mxu0
    %v1575 = vadd.f32 %v1472, %v1574
    %v1576 = vpop.f32.mrb[0].mxu0
    %v1577 = vadd.f32 %v1472, %v1576
    %1578 = vmatprep.mubr.bf16.mxu0 0
    %1579 = vmatmul.mubr.bf16.gmra.mrb[0].mxu0 %v1521
    %v1580 = vpop.f32.mrb[0].mxu0
    %v1581 = vadd.f32 %v1477, %v1580
    %v1582 = vpop.f32.mrb[0].mxu0
    %v1583 = vadd.f32 %v1477, %v1582
    %v1584 = vpop.f32.mrb[0].mxu0
    %v1585 = vadd.f32 %v1482, %v1584
    %v1586 = vpop.f32.mrb[0].mxu0
    %v1587 = vadd.f32 %v1482, %v1586
    %1588 = vmatprep.mubr.bf16.mxu0 0
    %1589 = vmatmul.mubr.bf16.gmra.mrb[0].mxu0 %v1524
    %v1590 = vpop.f32.mrb[0].mxu0
    %v1591 = vadd.f32 %v1487, %v1590
    %v1592 = vpop.f32.mrb[0].mxu0
    %v1593 = vadd.f32 %v1487, %v1592
    %v1594 = vpop.f32.mrb[0].mxu0
    %v1595 = vadd.f32 %v1492, %v1594
    %v1596 = vpop.f32.mrb[0].mxu0
    %v1597 = vadd.f32 %v1492, %v1596
    %1598 = vdwg.mxu0
    %v1599 = vtanh.pop %v1561
    %v1600 = vtanh.pop %v1563
    %v1601 = vtanh.pop %v1565
    %v1602 = vtanh.pop %v1567
    %v1603 = vtanh.pop %v1571
    %v1604 = vtanh.pop %v1573
    %v1605 = vtanh.pop %v1575
    %v1606 = vtanh.pop %v1577
    %v1607 = vxor.u32 %v1581, 2147483648
    %v1608 = vxor.u32 %v1583, 2147483648
    %v1609 = vxor.u32 %v1585, 2147483648
    %v1610 = vxor.u32 %v1587, 2147483648
    %v1611 = vxor.u32 %v1591, 2147483648
    %v1612 = vxor.u32 %v1593, 2147483648
    %v1613 = vxor.u32 %v1595, 2147483648
    %v1614 = vxor.u32 %v1597, 2147483648
    %v1615 = vmul.f32 %v1607, 1.442695
    %v1616 = vpow.pop %v1615
    %v1617 = vmul.f32 %v1608, 1.442695
    %v1618 = vpow.pop %v1617
    %v1619 = vmul.f32 %v1609, 1.442695
    %v1620 = vpow.pop %v1619
    %v1621 = vmul.f32 %v1610, 1.442695
    %v1622 = vpow.pop %v1621
    %v1623 = vmul.f32 %v1611, 1.442695
    %v1624 = vpow.pop %v1623
    %v1625 = vmul.f32 %v1612, 1.442695
    %v1626 = vpow.pop %v1625
    %v1627 = vmul.f32 %v1613, 1.442695
    %v1628 = vpow.pop %v1627
    %v1629 = vmul.f32 %v1614, 1.442695
    %v1630 = vpow.pop %v1629
    %v1631 = vadd.f32 %v1616, 1.0
    %v1632 = vadd.f32 %v1618, 1.0
    %v1633 = vadd.f32 %v1620, 1.0
    %v1634 = vadd.f32 %v1622, 1.0
    %v1635 = vadd.f32 %v1624, 1.0
    %v1636 = vadd.f32 %v1626, 1.0
    %v1637 = vadd.f32 %v1628, 1.0
    %v1638 = vadd.f32 %v1630, 1.0
    %v1639 = vrcp.pop %v1631
    %v1640 = vmul.f32 1.0, %v1639
    %v1641 = vrcp.pop %v1632
    %v1642 = vmul.f32 1.0, %v1641
    %v1643 = vrcp.pop %v1633
    %v1644 = vmul.f32 1.0, %v1643
    %v1645 = vrcp.pop %v1634
    %v1646 = vmul.f32 1.0, %v1645
    %v1647 = vrcp.pop %v1635
    %v1648 = vmul.f32 1.0, %v1647
    %v1649 = vrcp.pop %v1636
    %v1650 = vmul.f32 1.0, %v1649
    %v1651 = vrcp.pop %v1637
    %v1652 = vmul.f32 1.0, %v1651
    %v1653 = vrcp.pop %v1638
    %v1654 = vmul.f32 1.0, %v1653
    %v1655 = vmul.f32 %v1599, %v1640
    %v1656 = vmul.f32 %v1600, %v1642
    %v1657 = vmul.f32 %v1601, %v1644
    %v1658 = vmul.f32 %v1602, %v1646
    %v1659 = vmul.f32 %v1603, %v1648
    %v1660 = vmul.f32 %v1604, %v1650
    %v1661 = vmul.f32 %v1605, %v1652
    %v1662 = vmul.f32 %v1606, %v1654
    %v1663 = vpack.c.bf16 %v1657, %v1655
    %v1664 = vpack.c.bf16 %v1658, %v1656
    %v1665 = vpack.c.bf16 %v1661, %v1659
    %v1666 = vpack.c.bf16 %v1662, %v1660
    %s1667 = scalar_lea.vmem %s6, 64
    %v1668 = vld [vmem:[%s1667 + $0x10] sm:$0xf]
    %v1669 = vld [vmem:[%s1667 + $0x14] sm:$0xf]
    %v1670 = vld [vmem:[%s1667 + $0x18] sm:$0xf]
    %v1671 = vld [vmem:[%s1667 + $0x1c] sm:$0xf]
    %s1672 = scalar_lea.vmem %s7, 128
    %v1673 = vld [vmem:[%s1672 + $0x20] sm:$0xff]
    %v1674 = vld [vmem:[%s1672 + $0x28] sm:$0xff]
    %v1675 = vld [vmem:[%s1672 + $0x30] sm:$0xff]
    %v1676 = vld [vmem:[%s1672 + $0x38] sm:$0xff]
    %1678 = vset.pattern.permute.xlu0 0
    %1679 = vperm.xlu0 %1678, %v1673
    %v1680 = vpop.permute.xlu0 %1679
    %1683 = vset.pattern.permute.xlu0 0
    %1684 = vperm.xlu0 %1683, %v1674
    %v1685 = vpop.permute.xlu0 %1684
    %1688 = vset.pattern.permute.xlu0 0
    %1689 = vperm.xlu0 %1688, %v1675
    %v1690 = vpop.permute.xlu0 %1689
    %1693 = vset.pattern.permute.xlu0 0
    %1694 = vperm.xlu0 %1693, %v1676
    %v1695 = vpop.permute.xlu0 %1694
    %v1701 = vunpack.c.l.b16 %v1668
    %v1702 = vunpack.c.l.b16 %v1669
    %v1703 = vunpack.c.l.b16 %v1670
    %v1704 = vunpack.c.l.b16 %v1671
    %v1705 = vpack.c.b16 %v1702, %v1701
    %v1706 = vpack.c.b16 %v1704, %v1703
    %v1708 = vsel %vm640, %v1705, 0
    %v1711 = vsel %vm640, %v1706, 0
    %1713 = vmatprep.subr.bf16.mxu0 %v1664
    %1714 = vmatpush1.bf16.msra.mxu0 %v1663
    %1715 = vmatprep.subr.bf16.mxu0 %v1666
    %1716 = vmatpush1.bf16.msra.mxu0 %v1665
    %1717 = vmatprep.subr.bf16.mxu0 0
    %1718 = vmatpush1.bf16.msra.mxu0 0
    %1719 = vmatprep.subr.bf16.mxu0 0
    %1720 = vmatpush1.bf16.msra.mxu0 0
    %1721 = vmatprep.subr.bf16.mxu0 0
    %1722 = vmatpush1.bf16.msra.mxu0 0
    %1723 = vmatprep.subr.bf16.mxu0 0
    %1724 = vmatpush1.bf16.msra.mxu0 0
    %1725 = vmatprep.subr.bf16.mxu0 0
    %1726 = vmatpush1.bf16.msra.mxu0 0
    %1727 = vmatprep.subr.bf16.mxu0 0
    %1728 = vmatpush1.bf16.msra.mxu0 0
    %1729 = vmatprep.subr.bf16.mxu0 0
    %1730 = vmatpush1.bf16.msra.mxu0 0
    %1731 = vmatprep.subr.bf16.mxu0 0
    %1732 = vmatpush1.bf16.msra.mxu0 0
    %1733 = vmatprep.subr.bf16.mxu0 0
    %1734 = vmatpush1.bf16.msra.mxu0 0
    %1735 = vmatprep.subr.bf16.mxu0 0
    %1736 = vmatpush1.bf16.msra.mxu0 0
    %1737 = vmatprep.subr.bf16.mxu0 0
    %1738 = vmatpush1.bf16.msra.mxu0 0
    %1739 = vmatprep.subr.bf16.mxu0 0
    %1740 = vmatpush1.bf16.msra.mxu0 0
    %1741 = vmatprep.subr.bf16.mxu0 0
    %1742 = vmatpush1.bf16.msra.mxu0 0
    %1743 = vmatprep.subr.bf16.mxu0 0
    %1744 = vmatpush1.bf16.msra.mxu0 0
    %1745 = vmatprep.mubr.bf16.mxu0 0
    %1746 = vmatmul.mubr.bf16.gmra.mrb[0].mxu0 %v1708
    %v1747 = vpop.f32.mrb[0].mxu0
    %v1748 = vadd.f32 %v1680, %v1747
    %v1749 = vpop.f32.mrb[0].mxu0
    %v1750 = vadd.f32 %v1680, %v1749
    %v1751 = vpop.f32.mrb[0].mxu0
    %v1752 = vadd.f32 %v1685, %v1751
    %v1753 = vpop.f32.mrb[0].mxu0
    %v1754 = vadd.f32 %v1685, %v1753
    %1755 = vmatprep.mubr.bf16.mxu0 0
    %1756 = vmatmul.mubr.bf16.gmra.mrb[0].mxu0 %v1711
    %v1757 = vpop.f32.mrb[0].mxu0
    %v1758 = vadd.f32 %v1690, %v1757
    %v1759 = vpop.f32.mrb[0].mxu0
    %v1760 = vadd.f32 %v1690, %v1759
    %v1761 = vpop.f32.mrb[0].mxu0
    %v1762 = vadd.f32 %v1695, %v1761
    %v1763 = vpop.f32.mrb[0].mxu0
    %v1764 = vadd.f32 %v1695, %v1763
    %1765 = vdwg.mxu0
    %v1766 = vadd.f32 %v1294, %v1748
    %v1767 = vadd.f32 %v1295, %v1750
    %v1768 = vadd.f32 %v1296, %v1752
    %v1769 = vadd.f32 %v1297, %v1754
    %v1770 = vadd.f32 %v1298, %v1758
    %v1771 = vadd.f32 %v1299, %v1760
    %v1772 = vadd.f32 %v1300, %v1762
    %v1773 = vadd.f32 %v1301, %v1764
    %v1774 = vmul.f32 %v1766, %v160
    %v1775 = vmul.f32 %v1767, %v164
    %v1776 = vmul.f32 %v1768, %v160
    %v1777 = vmul.f32 %v1769, %v164
    %v1778 = vmul.f32 %v1770, %v160
    %v1779 = vmul.f32 %v1771, %v164
    %v1780 = vmul.f32 %v1772, %v160
    %v1781 = vmul.f32 %v1773, %v164
    %v1782 = vld [vmem:[%s8] sm:$0xf]
    %v1783 = vld [vmem:[%s9] sm:$0xf]
    %1785 = vset.pattern.permute.xlu0 0
    %1786 = vperm.xlu0 %1785, %v1783
    %v1787 = vpop.permute.xlu0 %1786
    %v1790 = vsel %vm640, %v1782, 0
    %1792 = vmatprep.subr.mxu0 %v1775
    %1793 = vmatpush1.msra.mxu0 %v1774
    %1794 = vmatprep.subr.mxu0 %v1777
    %1795 = vmatpush1.msra.mxu0 %v1776
    %1796 = vmatprep.subr.mxu0 %v1779
    %1797 = vmatpush1.msra.mxu0 %v1778
    %1798 = vmatprep.subr.mxu0 %v1781
    %1799 = vmatpush1.msra.mxu0 %v1780
    %1800 = vmatprep.subr.mxu0 0.0
    %1801 = vmatpush1.msra.mxu0 0.0
    %1802 = vmatprep.subr.mxu0 0.0
    %1803 = vmatpush1.msra.mxu0 0.0
    %1804 = vmatprep.subr.mxu0 0.0
    %1805 = vmatpush1.msra.mxu0 0.0
    %1806 = vmatprep.subr.mxu0 0.0
    %1807 = vmatpush1.msra.mxu0 0.0
    %1808 = vmatprep.subr.mxu0 0.0
    %1809 = vmatpush1.msra.mxu0 0.0
    %1810 = vmatprep.subr.mxu0 0.0
    %1811 = vmatpush1.msra.mxu0 0.0
    %1812 = vmatprep.subr.mxu0 0.0
    %1813 = vmatpush1.msra.mxu0 0.0
    %1814 = vmatprep.subr.mxu0 0.0
    %1815 = vmatpush1.msra.mxu0 0.0
    %1816 = vmatprep.subr.mxu0 0.0
    %1817 = vmatpush1.msra.mxu0 0.0
    %1818 = vmatprep.subr.mxu0 0.0
    %1819 = vmatpush1.msra.mxu0 0.0
    %1820 = vmatprep.subr.mxu0 0.0
    %1821 = vmatpush1.msra.mxu0 0.0
    %1822 = vmatprep.subr.mxu0 0.0
    %1823 = vmatpush1.msra.mxu0 0.0
    %1824 = vmatprep.subr.mxu0 0.0
    %1825 = vmatpush1.msra.mxu0 0.0
    %1826 = vmatprep.subr.mxu0 0.0
    %1827 = vmatpush1.msra.mxu0 0.0
    %1828 = vmatprep.subr.mxu0 0.0
    %1829 = vmatpush1.msra.mxu0 0.0
    %1830 = vmatprep.subr.mxu0 0.0
    %1831 = vmatpush1.msra.mxu0 0.0
    %1832 = vmatprep.subr.mxu0 0.0
    %1833 = vmatpush1.msra.mxu0 0.0
    %1834 = vmatprep.subr.mxu0 0.0
    %1835 = vmatpush1.msra.mxu0 0.0
    %1836 = vmatprep.subr.mxu0 0.0
    %1837 = vmatpush1.msra.mxu0 0.0
    %1838 = vmatprep.subr.mxu0 0.0
    %1839 = vmatpush1.msra.mxu0 0.0
    %1840 = vmatprep.subr.mxu0 0.0
    %1841 = vmatpush1.msra.mxu0 0.0
    %1842 = vmatprep.subr.mxu0 0.0
    %1843 = vmatpush1.msra.mxu0 0.0
    %1844 = vmatprep.subr.mxu0 0.0
    %1845 = vmatpush1.msra.mxu0 0.0
    %1846 = vmatprep.subr.mxu0 0.0
    %1847 = vmatpush1.msra.mxu0 0.0
    %1848 = vmatprep.subr.mxu0 0.0
    %1849 = vmatpush1.msra.mxu0 0.0
    %1850 = vmatprep.subr.mxu0 0.0
    %1851 = vmatpush1.msra.mxu0 0.0
    %1852 = vmatprep.subr.mxu0 0.0
    %1853 = vmatpush1.msra.mxu0 0.0
    %1854 = vmatprep.subr.mxu0 0.0
    %1855 = vmatpush1.msra.mxu0 0.0
    %1856 = vmatprep.mubr.f32.mxu0 0.0
    %1857 = vmatmul.mubr.f32.gmra.mrb[0].mxu0 %v1790
    %v1858 = vpop.f32.mrb[0].mxu0
    %v1859 = vadd.f32 %v1787, %v1858
    %v1860 = vpop.f32.mrb[0].mxu0
    %v1861 = vadd.f32 %v1787, %v1860
    %1862 = vdwg.mxu0
    %v1863 = vmul.f32 %v1859, 1.442695
    %v1864 = vpow.pop %v1863
    %v1865 = vmul.f32 %v1861, 1.442695
    %v1866 = vpow.pop %v1865
    %v1869 = vrot.slane %v1864, 2
    %v1870 = vrot.slane %v1866, 2
    %v1873 = vmul.f32 %v40, %v1869
    %v1874 = vmul.f32 %v41, %v1870
    %v1875 = vadd.f32 %v1873, %v1859
    %v1876 = vadd.f32 %v1874, %v1861
    %v1877 = vmul.f32 %v1875, %v160
    %v1878 = vmul.f32 %v1876, %v164
    %v1879 = vmul.f32 %v1859, %v160
    %v1880 = vmul.f32 %v1861, %v164
    %vm1881 = vcmask 1041408
    %v1882 = vsel %vm1881, %v1877, %v40
    %1883 = vst [vmem:[#allocation2] sm:$0xf] %v1882
    %vm1884 = vcmask 1043458
    %v1885 = vsel %vm1884, %v1879, 0.0
    %1886 = vadd.xlane.f32.xlu0 %v1885
    %v1887 = vpop.xlane.xlu0 %1886
    %v1889 = vrot.slane %v1887, 2
    %v1891 = vsel %vm1881, %v1889, 0.0
    %v1892 = vrot.slane %v1891, 4
    %v1893 = vadd.f32 %v1891, %v1892
    %v1894 = vrot.slane %v1893, 2
    %v1895 = vadd.f32 %v1893, %v1894
    %v1896 = vrot.slane %v1895, 1
    %v1897 = vadd.f32 %v1895, %v1896
    %v1898 = vsel %vm1881, %v1878, %v41
    %s1899 = scalar_lea.vmem [#allocation2], 4
    %1900 = vst [vmem:[%s1899] sm:$0xf] %v1898
    %v1901 = vsel %vm1884, %v1880, 0.0
    %1902 = vadd.xlane.f32.xlu0 %v1901
    %v1903 = vpop.xlane.xlu0 %1902
    %v1905 = vrot.slane %v1903, 2
    %v1907 = vsel %vm1881, %v1905, 0.0
    %v1908 = vrot.slane %v1907, 4
    %v1909 = vadd.f32 %v1907, %v1908
    %v1910 = vrot.slane %v1909, 2
    %v1911 = vadd.f32 %v1909, %v1910
    %v1912 = vrot.slane %v1911, 1
    %v1913 = vadd.f32 %v1911, %v1912
    %vm1914 = vcmask 1040384
    %v1915 = vsel %vm1914, %v1897, %v1913
    %1916 = vst [vmem:[#allocation4] sm:$0x3] %v1915
    // Predicated region
    $region42: #{tpu_custom_call.1} parent=1 // pred_check
      _
    $region43: #{tpu_custom_call.1} parent=1 // pred_check_branch
      %1918 = sbr.rel (0) target = $region45
    $region44: #{tpu_custom_call.1} parent=1 // pred_region
      %s1920 = ssub.s32 128, 128
      %1921 = vsyncadd [#allocation3], %s1920
      %s1922 = sshll.u32 [#allocation2], 4
      %s1923 = int_to_ptr.vmem [resolvable:$true] %s1922
      %1928 = dma.vmem_to_hbm [thread:$0]  %s1923, 128, %s10, [#allocation3], 64, 64, 4
    $region45: #{tpu_custom_call.1} parent=1 // pred_fallthru
      _
    // Predicated region
    $region46: #{tpu_custom_call.1} parent=1 // pred_check
      _
    $region47: #{tpu_custom_call.1} parent=1 // pred_check_branch
      %1930 = sbr.rel (0) target = $region49
    $region48: #{tpu_custom_call.1} parent=1 // pred_region
      %s1932 = ssub.s32 32, 32
      %1933 = vsyncadd [#allocation5], %s1932
      %s1935 = sshll.u32 [#allocation4], 4
      %s1936 = int_to_ptr.vmem [resolvable:$true] %s1935
      %1938 = dma.vmem_to_hbm [thread:$0]  %s1936, 32, %s11, [#allocation5]
    $region49: #{tpu_custom_call.1} parent=1 // pred_fallthru
      _
    // Predicated region
    $region50: #{tpu_custom_call.1} parent=1 // pred_check
      _
    $region51: #{tpu_custom_call.1} parent=1 // pred_check_branch
      %1940 = sbr.rel (0) target = $region53
    $region52: #{tpu_custom_call.1} parent=1 // pred_region
      %1941 = dma.done [#allocation3], 128
    $region53: #{tpu_custom_call.1} parent=1 // pred_fallthru
      _
    // Predicated region
    $region54: #{tpu_custom_call.1} parent=1 // pred_check
      _
    $region55: #{tpu_custom_call.1} parent=1 // pred_check_branch
      %1943 = sbr.rel (0) target = $region57
    $region56: #{tpu_custom_call.1} parent=1 // pred_region
      %1944 = dma.done [#allocation5], 32
    $region57: #{tpu_custom_call.1} parent=1 // pred_fallthru
      _
    %1945 = vsyncpa [#allocation3], 1
    %1946 = vsyncpa [#allocation5], 1

</llo_original>
